<compile_context>
chip_gen: v7x
topology: tpu7x:2x2x1
jax: 0.10.0
libtpu: 0.0.40
codegen_flags: <defaults>
</compile_context>

<pallas_src>
import functools

import jax
import jax.numpy as jnp
import numpy as np
from jax import lax
from jax.experimental import pallas as pl
from jax.experimental.pallas import tpu as pltpu


# ----------------------------------------------------------------------------
# Fused kernel: conv1 -> conv2 -> conv3 -> fc1 -> fc2  (all in VMEM)
# ----------------------------------------------------------------------------
def _qrdqn_fused_kernel(lhs1_ref, w1_ref, w23_ref, w4_ref, w5_ref, b_ref, o_ref):
    f32 = jnp.float32
    cdt = w1_ref.dtype                       # MXU operand dtype (bf16 / f32)
    B = o_ref.shape[0]
    out_pad = o_ref.shape[1]

    # ---- conv1: one matmul (K = 144*C); output columns are already the
    #      space-to-depth-by-2 layout (p2, q2, filter) that conv2 needs.
    c1 = jnp.dot(lhs1_ref[...], w1_ref[...],
                 preferred_element_type=f32)                     # (B*16, 128)
    c1 = jnp.maximum(c1 + b_ref[0:1, 0:128], 0.0)
    c1s = c1.astype(cdt).reshape(B, 4, 4, 128)                   # (B, 4, 4, 128)

    # ---- conv2: 2x2 stride-1 taps over the s2d grid, folded into K = 512 so
    #      the accumulation stays inside the MXU; exactly the 9 valid stride-2
    #      output positions are produced (VALID conv, no padding needed).
    lhs2 = jnp.concatenate(
        [c1s[:, di:di + 3, dj:dj + 3, :].reshape(B * 9, 128)
         for di in (0, 1) for dj in (0, 1)], axis=-1)            # (B*9, 512)
    c2 = jnp.dot(lhs2, w23_ref[0:512, :],
                 preferred_element_type=f32)                     # (B*9, 64)
    c2 = jnp.maximum(c2 + b_ref[1:2, 0:64], 0.0)

    # ---- conv3: 3x3 conv on a 3x3 map == a single matmul with K = 576.
    c2r = c2.reshape(B, 3, 3, 64)
    feat = jnp.concatenate([c2r[:, i, j, :] for i in range(3) for j in range(3)],
                           axis=-1).astype(cdt)                  # (B, 576)
    c3 = jnp.dot(feat, w23_ref[512:1088, :], preferred_element_type=f32)
    c3 = jnp.maximum(c3 + b_ref[2:3, 0:64], 0.0)                 # (B, 64)

    # ---- fc1 (ReLU) and fc2 (output padded to a lane-dense 128 multiple) ----
    h = jnp.dot(c3.astype(cdt), w4_ref[...], preferred_element_type=f32)
    h = jnp.maximum(h + b_ref[3:4, 0:512], 0.0)                  # (B, 512)
    out = jnp.dot(h.astype(cdt), w5_ref[...], preferred_element_type=f32)
    o_ref[...] = out + b_ref[4:5, 0:out_pad]                     # (B, out_pad)


def _vmem_spec(shape):
    zeros = (0,) * len(shape)
    return pl.BlockSpec(shape, lambda *_: zeros)


# ----------------------------------------------------------------------------
# Wrapper: one-time layout plumbing + single pallas_call
# ----------------------------------------------------------------------------
def _build_conv1_lhs(x, compute_dtype):
    """(B, C, 36, 36) NCHW -> (B*16, 144*C) patch matrix for the fused conv1.

    Row (b, r, s) holds the 12x12 input patch at stride 8, laid out as 3x3
    windows of the space-to-depth-by-4 slab, channel order (wi, wj, p4, q4, c).
    """
    B, C, H, W = x.shape
    t = x.reshape(B, C, H // 4, 4, W // 4, 4)          # b c R p4 S q4
    t = jnp.transpose(t, (0, 2, 4, 3, 5, 1))           # b R S p4 q4 c
    t = t.reshape(B, H // 4, W // 4, 16 * C)           # (B, 9, 9, 16C)
    pieces = [t[:, wi:wi + 7:2, wj:wj + 7:2, :]        # (B, 4, 4, 16C) each
              for wi in range(3) for wj in range(3)]
    lhs = jnp.concatenate(pieces, axis=-1)             # (B, 4, 4, 144C)
    return lhs.reshape(B * 16, 144 * C).astype(compute_dtype)


def qrdqn_forward(x, params, action_num, num_quantiles, state=None):
    # DQN.forward's channel-last auto-transpose heuristic (inherited behavior).
    if x.shape[-1] < x.shape[1]:
        x = jnp.transpose(x, (0, 3, 1, 2))
    x = x.astype(jnp.float32)
    B, C, H, W = x.shape
    # Fused kernel is specialized to the 36x36 geometry (36 -> 8 -> 3 -> 1).
    assert H == 36 and W == 36, "fused QRDQN kernel expects 36x36 inputs"
    assert params["w1"].shape[0] == 144 * C

    lhs1 = _build_conv1_lhs(x, params["w1"].dtype)     # (B*16, 144C), bf16
    out_pad = params["w5"].shape[1]
    out_dim = action_num * num_quantiles

    args = (lhs1, params["w1"], params["w23"], params["w4"], params["w5"],
            params["biases"])

    out = pl.pallas_call(
        _qrdqn_fused_kernel,
        out_shape=jax.ShapeDtypeStruct((B, out_pad), jnp.float32),
        in_specs=[_vmem_spec(a.shape) for a in args],
        out_specs=_vmem_spec((B, out_pad)),
        compiler_params=pltpu.CompilerParams(vmem_limit_bytes=32 * 1024 * 1024),
        cost_estimate=pl.CostEstimate(flops=6_500_000, transcendentals=0,
                                      bytes_accessed=550_000),
    )(*args)

    out = out[:, :out_dim].reshape(-1, action_num, num_quantiles)
    return out, state


# ----------------------------------------------------------------------------
# Parameter construction (raw HWIO weights) + one-time packing to kernel layout
# ----------------------------------------------------------------------------
def init_qrdqn_params(key, c, h, w, action_num, num_quantiles):
    def conv_out(size, k, s):
        return (size - k) // s + 1

    h1, w1 = conv_out(h, 8, 4), conv_out(w, 8, 4)
    h2, w2 = conv_out(h1, 4, 2), conv_out(w1, 4, 2)
    h3, w3 = conv_out(h2, 3, 1), conv_out(w2, 3, 1)
    feat_dim = 64 * h3 * w3
    out_dim = action_num * num_quantiles
    ks = jax.random.split(key, 10)

    def init_w(k, shape, fan_in):
        return jax.random.normal(k, shape, jnp.float32) / np.sqrt(fan_in)

    raw = {
        "w1": init_w(ks[0], (8, 8, c, 32), 8 * 8 * c),      # HWIO
        "b1": 0.01 * jax.random.normal(ks[1], (32,), jnp.float32),
        "w2": init_w(ks[2], (4, 4, 32, 64), 4 * 4 * 32),
        "b2": 0.01 * jax.random.normal(ks[3], (64,), jnp.float32),
        "w3": init_w(ks[4], (3, 3, 64, 64), 3 * 3 * 64),
        "b3": 0.01 * jax.random.normal(ks[5], (64,), jnp.float32),
        "wl1": init_w(ks[6], (feat_dim, 512), feat_dim),
        "bl1": 0.01 * jax.random.normal(ks[7], (512,), jnp.float32),
        "wl2": init_w(ks[8], (512, out_dim), 512),
        "bl2": 0.01 * jax.random.normal(ks[9], (out_dim,), jnp.float32),
    }
    return raw, feat_dim


def pack_params(raw, compute_dtype=jnp.bfloat16):
    """One-time repack into kernel-ready 2D matrices / dtypes."""
    f32 = np.float32
    C = raw["w1"].shape[2]

    # conv1: block-sparse "big" weight.  Rows ordered (wi, wj, p4, q4, c)
    # matching the wrapper-side patch layout; cols ordered (p2, q2, filter)
    # so the matmul output is already space-to-depth-by-2 for conv2.
    w1 = np.asarray(raw["w1"], f32)                           # (8, 8, C, 32)
    w1big = np.zeros((3, 3, 4, 4, C, 2, 2, 32), f32)
    for p2 in range(2):
        for q2 in range(2):
            for di in range(2):
                for dj in range(2):
                    w1big[p2 + di, q2 + dj, :, :, :, p2, q2, :] = \
                        w1[4 * di:4 * di + 4, 4 * dj:4 * dj + 4, :, :]
    w1big = w1big.reshape(144 * C, 128)
    b1big = np.tile(np.asarray(raw["b1"], f32), 4)            # (128,)

    # conv2: rows ordered (di2, dj2, p2, q2, c) to match the in-kernel tap
    # concat over the s2d-by-2 conv1 output.  conv3 rows are (i3, j3, c).
    w2 = np.asarray(raw["w2"], f32).reshape(2, 2, 2, 2, 32, 64)   # di p2 dj q2 c o
    w2p = np.transpose(w2, (0, 2, 1, 3, 4, 5)).reshape(512, 64)   # (di,dj,p2,q2,c)
    w3p = np.asarray(raw["w3"], f32).reshape(576, 64)
    w23 = np.concatenate([w2p, w3p], axis=0)                      # (1088, 64)

    w4 = np.asarray(raw["wl1"], f32)                              # (64, 512)
    out_dim = raw["wl2"].shape[1]
    out_pad = ((out_dim + 127) // 128) * 128                      # lane-dense fc2
    w5p = np.zeros((512, out_pad), f32)
    w5p[:, :out_dim] = np.asarray(raw["wl2"], f32)

    bw = max(512, out_pad)
    biases = np.zeros((5, bw), f32)                               # one bias operand
    biases[0, :128] = b1big
    biases[1, :64] = np.asarray(raw["b2"], f32)
    biases[2, :64] = np.asarray(raw["b3"], f32)
    biases[3, :512] = np.asarray(raw["bl1"], f32)
    biases[4, :out_dim] = np.asarray(raw["bl2"], f32)

    return {
        "w1": jnp.asarray(w1big, compute_dtype),
        "w23": jnp.asarray(w23, compute_dtype),
        "w4": jnp.asarray(w4, compute_dtype),
        "w5": jnp.asarray(w5p, compute_dtype),
        "biases": jnp.asarray(biases, jnp.float32),
    }


# ----------------------------------------------------------------------------
# Plain-JAX reference (validation only)
# ----------------------------------------------------------------------------
def reference_forward(x, raw, action_num, num_quantiles):
    if x.shape[-1] < x.shape[1]:
        x = jnp.transpose(x, (0, 3, 1, 2))
    x = x.astype(jnp.float32)
    x = jnp.transpose(x, (0, 2, 3, 1))                 # NHWC
    hp = lax.Precision.HIGHEST

    def conv(x, w, b, s):
        dn = lax.conv_dimension_numbers(x.shape, w.shape, ("NHWC", "HWIO", "NHWC"))
        y = lax.conv_general_dilated(x, w, (s, s), "VALID",
                                     dimension_numbers=dn, precision=hp)
        return jax.nn.relu(y + b)

    x = conv(x, raw["w1"], raw["b1"], 4)
    x = conv(x, raw["w2"], raw["b2"], 2)
    x = conv(x, raw["w3"], raw["b3"], 1)
    # nn.Flatten on NCHW; spatial is 1x1 so this is just a reshape.
    x = jnp.transpose(x, (0, 3, 1, 2)).reshape(x.shape[0], -1)
    x = jax.nn.relu(jnp.dot(x, raw["wl1"], precision=hp) + raw["bl1"])
    x = jnp.dot(x, raw["wl2"], precision=hp) + raw["bl2"]
    return x.reshape(-1, action_num, num_quantiles)


if __name__ == "__main__":
    # 36x36 input -> conv spatial path 8x8 -> 3x3 -> 1x1 (feat_dim = 64).
    batch, c, h, w = 2, 4, 36, 36
    action_num, num_quantiles = 4, 16

    key = jax.random.PRNGKey(0)
    pkey, xkey = jax.random.split(key)
    raw, feat_dim = init_qrdqn_params(pkey, c, h, w, action_num, num_quantiles)
    assert feat_dim == 64

    x = jax.random.normal(xkey, (batch, c, h, w), jnp.float32)  # NCHW input

    ref = reference_forward(x, raw, action_num, num_quantiles)

    fwd = jax.jit(functools.partial(qrdqn_forward,
                                    action_num=action_num,
                                    num_quantiles=num_quantiles))

    # (a) Structural sanity run with f32 matmul operands (checks the weight
    #     packing / tap ordering through an independent compile).  Tolerance
    #     is kept loose so MXU pass-precision differences across TPU
    #     generations can never flake the run; packing bugs give O(1) errors.
    out32, _ = fwd(x, pack_params(raw, compute_dtype=jnp.float32))
    out32 = jax.block_until_ready(out32)
    np.testing.assert_allclose(np.asarray(out32), np.asarray(ref),
                               rtol=0.1, atol=0.1)

    # (b) Production run: bf16 MXU operands, f32 accumulation/epilogues.
    params = pack_params(raw, compute_dtype=jnp.bfloat16)
    out, state = fwd(x, params)
    out = jax.block_until_ready(out)

    assert out.shape == (batch, action_num, num_quantiles), out.shape
    assert out.dtype == jnp.float32
    assert bool(jnp.all(jnp.isfinite(out)))
    np.testing.assert_allclose(np.asarray(out), np.asarray(ref),
                               rtol=0.1, atol=0.1)
    print("KERNEL_OK")
</pallas_src>

<mosaic_0001>
module attributes {stable_mosaic.version = 11 : i64} {
  func.func @_qrdqn_fused_kernel(%arg0: memref<32x576xf32, #tpu.memory_space<vmem>>, %arg1: memref<576x128xf32, #tpu.memory_space<vmem>>, %arg2: memref<1088x64xf32, #tpu.memory_space<vmem>>, %arg3: memref<64x512xf32, #tpu.memory_space<vmem>>, %arg4: memref<512x128xf32, #tpu.memory_space<vmem>>, %arg5: memref<5x512xf32, #tpu.memory_space<vmem>>, %arg6: memref<2x128xf32, #tpu.memory_space<vmem>>) attributes {dimension_semantics = [], scalar_prefetch = 0 : i64, scratch_operands = 0 : i64, tpu.core_type = #tpu.core_type<tc>} {
    %c0 = arith.constant 0 : index
    %c0_0 = arith.constant 0 : index
    %0 = vector.load %arg0[%c0, %c0_0] : memref<32x576xf32, #tpu.memory_space<vmem>>, vector<32x576xf32>
    %c0_1 = arith.constant 0 : index
    %c0_2 = arith.constant 0 : index
    %1 = vector.load %arg1[%c0_1, %c0_2] : memref<576x128xf32, #tpu.memory_space<vmem>>, vector<576x128xf32>
    %cst = arith.constant dense<0.000000e+00> : vector<32x128xf32>
    %2 = tpu.matmul %0, %1, %cst {dimension_numbers = #tpu.dot_dimension_numbers<[1], [0], [0], [1], [0, 0, 1, 1], [], []>} : vector<32x576xf32>, vector<576x128xf32>, vector<32x128xf32> -> vector<32x128xf32>
    %c0_3 = arith.constant 0 : index
    %c0_4 = arith.constant 0 : index
    %3 = vector.load %arg5[%c0_3, %c0_4] : memref<5x512xf32, #tpu.memory_space<vmem>>, vector<1x128xf32>
    %4 = vector.broadcast %3 : vector<1x128xf32> to vector<32x128xf32>
    %5 = arith.addf %2, %4 : vector<32x128xf32>
    %cst_5 = arith.constant 0.000000e+00 : f32
    %6 = vector.broadcast %cst_5 : f32 to vector<32x128xf32>
    %7 = arith.maximumf %5, %6 : vector<32x128xf32>
    %8 = vector.shape_cast %7 : vector<32x128xf32> to vector<2x4x4x128xf32>
    %9 = vector.extract_strided_slice %8 {offsets = [0, 0, 0, 0], sizes = [2, 3, 3, 128], strides = [1, 1, 1, 1]} : vector<2x4x4x128xf32> to vector<2x3x3x128xf32>
    %10 = vector.shape_cast %9 : vector<2x3x3x128xf32> to vector<18x128xf32>
    %11 = vector.extract_strided_slice %8 {offsets = [0, 0, 1, 0], sizes = [2, 3, 3, 128], strides = [1, 1, 1, 1]} : vector<2x4x4x128xf32> to vector<2x3x3x128xf32>
    %12 = vector.shape_cast %11 : vector<2x3x3x128xf32> to vector<18x128xf32>
    %13 = vector.extract_strided_slice %8 {offsets = [0, 1, 0, 0], sizes = [2, 3, 3, 128], strides = [1, 1, 1, 1]} : vector<2x4x4x128xf32> to vector<2x3x3x128xf32>
    %14 = vector.shape_cast %13 : vector<2x3x3x128xf32> to vector<18x128xf32>
    %15 = vector.extract_strided_slice %8 {offsets = [0, 1, 1, 0], sizes = [2, 3, 3, 128], strides = [1, 1, 1, 1]} : vector<2x4x4x128xf32> to vector<2x3x3x128xf32>
    %16 = vector.shape_cast %15 : vector<2x3x3x128xf32> to vector<18x128xf32>
    %17 = tpu.concatenate %10, %12, %14, %16 in 1 : vector<18x128xf32>, vector<18x128xf32>, vector<18x128xf32>, vector<18x128xf32> -> vector<18x512xf32>
    %c0_6 = arith.constant 0 : index
    %c0_7 = arith.constant 0 : index
    %18 = vector.load %arg2[%c0_6, %c0_7] : memref<1088x64xf32, #tpu.memory_space<vmem>>, vector<512x64xf32>
    %cst_8 = arith.constant dense<0.000000e+00> : vector<18x64xf32>
    %19 = tpu.matmul %17, %18, %cst_8 {dimension_numbers = #tpu.dot_dimension_numbers<[1], [0], [0], [1], [0, 0, 1, 1], [], []>} : vector<18x512xf32>, vector<512x64xf32>, vector<18x64xf32> -> vector<18x64xf32>
    %c1 = arith.constant 1 : index
    %c0_9 = arith.constant 0 : index
    %20 = vector.load %arg5[%c1, %c0_9] : memref<5x512xf32, #tpu.memory_space<vmem>>, vector<1x64xf32>
    %21 = vector.broadcast %20 : vector<1x64xf32> to vector<18x64xf32>
    %22 = arith.addf %19, %21 : vector<18x64xf32>
    %cst_10 = arith.constant 0.000000e+00 : f32
    %23 = vector.broadcast %cst_10 : f32 to vector<18x64xf32>
    %24 = arith.maximumf %22, %23 : vector<18x64xf32>
    %25 = vector.shape_cast %24 : vector<18x64xf32> to vector<2x3x3x64xf32>
    %26 = vector.extract_strided_slice %25 {offsets = [0, 0, 0, 0], sizes = [2, 1, 1, 64], strides = [1, 1, 1, 1]} : vector<2x3x3x64xf32> to vector<2x1x1x64xf32>
    %27 = vector.shape_cast %26 : vector<2x1x1x64xf32> to vector<2x64xf32>
    %28 = vector.extract_strided_slice %25 {offsets = [0, 0, 1, 0], sizes = [2, 1, 1, 64], strides = [1, 1, 1, 1]} : vector<2x3x3x64xf32> to vector<2x1x1x64xf32>
    %29 = vector.shape_cast %28 : vector<2x1x1x64xf32> to vector<2x64xf32>
    %30 = vector.extract_strided_slice %25 {offsets = [0, 0, 2, 0], sizes = [2, 1, 1, 64], strides = [1, 1, 1, 1]} : vector<2x3x3x64xf32> to vector<2x1x1x64xf32>
    %31 = vector.shape_cast %30 : vector<2x1x1x64xf32> to vector<2x64xf32>
    %32 = vector.extract_strided_slice %25 {offsets = [0, 1, 0, 0], sizes = [2, 1, 1, 64], strides = [1, 1, 1, 1]} : vector<2x3x3x64xf32> to vector<2x1x1x64xf32>
    %33 = vector.shape_cast %32 : vector<2x1x1x64xf32> to vector<2x64xf32>
    %34 = vector.extract_strided_slice %25 {offsets = [0, 1, 1, 0], sizes = [2, 1, 1, 64], strides = [1, 1, 1, 1]} : vector<2x3x3x64xf32> to vector<2x1x1x64xf32>
    %35 = vector.shape_cast %34 : vector<2x1x1x64xf32> to vector<2x64xf32>
    %36 = vector.extract_strided_slice %25 {offsets = [0, 1, 2, 0], sizes = [2, 1, 1, 64], strides = [1, 1, 1, 1]} : vector<2x3x3x64xf32> to vector<2x1x1x64xf32>
    %37 = vector.shape_cast %36 : vector<2x1x1x64xf32> to vector<2x64xf32>
    %38 = vector.extract_strided_slice %25 {offsets = [0, 2, 0, 0], sizes = [2, 1, 1, 64], strides = [1, 1, 1, 1]} : vector<2x3x3x64xf32> to vector<2x1x1x64xf32>
    %39 = vector.shape_cast %38 : vector<2x1x1x64xf32> to vector<2x64xf32>
    %40 = vector.extract_strided_slice %25 {offsets = [0, 2, 1, 0], sizes = [2, 1, 1, 64], strides = [1, 1, 1, 1]} : vector<2x3x3x64xf32> to vector<2x1x1x64xf32>
    %41 = vector.shape_cast %40 : vector<2x1x1x64xf32> to vector<2x64xf32>
    %42 = vector.extract_strided_slice %25 {offsets = [0, 2, 2, 0], sizes = [2, 1, 1, 64], strides = [1, 1, 1, 1]} : vector<2x3x3x64xf32> to vector<2x1x1x64xf32>
    %43 = vector.shape_cast %42 : vector<2x1x1x64xf32> to vector<2x64xf32>
    %44 = tpu.concatenate %27, %29, %31, %33, %35, %37, %39, %41, %43 in 1 : vector<2x64xf32>, vector<2x64xf32>, vector<2x64xf32>, vector<2x64xf32>, vector<2x64xf32>, vector<2x64xf32>, vector<2x64xf32>, vector<2x64xf32>, vector<2x64xf32> -> vector<2x576xf32>
    %c512 = arith.constant 512 : index
    %c0_11 = arith.constant 0 : index
    %45 = vector.load %arg2[%c512, %c0_11] : memref<1088x64xf32, #tpu.memory_space<vmem>>, vector<576x64xf32>
    %cst_12 = arith.constant dense<0.000000e+00> : vector<2x64xf32>
    %46 = tpu.matmul %44, %45, %cst_12 {dimension_numbers = #tpu.dot_dimension_numbers<[1], [0], [0], [1], [0, 0, 1, 1], [], []>} : vector<2x576xf32>, vector<576x64xf32>, vector<2x64xf32> -> vector<2x64xf32>
    %c2 = arith.constant 2 : index
    %c0_13 = arith.constant 0 : index
    %47 = vector.load %arg5[%c2, %c0_13] : memref<5x512xf32, #tpu.memory_space<vmem>>, vector<1x64xf32>
    %48 = vector.broadcast %47 : vector<1x64xf32> to vector<2x64xf32>
    %49 = arith.addf %46, %48 : vector<2x64xf32>
    %cst_14 = arith.constant 0.000000e+00 : f32
    %50 = vector.broadcast %cst_14 : f32 to vector<2x64xf32>
    %51 = arith.maximumf %49, %50 : vector<2x64xf32>
    %c0_15 = arith.constant 0 : index
    %c0_16 = arith.constant 0 : index
    %52 = vector.load %arg3[%c0_15, %c0_16] : memref<64x512xf32, #tpu.memory_space<vmem>>, vector<64x512xf32>
    %cst_17 = arith.constant dense<0.000000e+00> : vector<2x512xf32>
    %53 = tpu.matmul %51, %52, %cst_17 {dimension_numbers = #tpu.dot_dimension_numbers<[1], [0], [0], [1], [0, 0, 1, 1], [], []>} : vector<2x64xf32>, vector<64x512xf32>, vector<2x512xf32> -> vector<2x512xf32>
    %c3 = arith.constant 3 : index
    %c0_18 = arith.constant 0 : index
    %54 = vector.load %arg5[%c3, %c0_18] : memref<5x512xf32, #tpu.memory_space<vmem>>, vector<1x512xf32>
    %55 = vector.broadcast %54 : vector<1x512xf32> to vector<2x512xf32>
    %56 = arith.addf %53, %55 : vector<2x512xf32>
    %cst_19 = arith.constant 0.000000e+00 : f32
    %57 = vector.broadcast %cst_19 : f32 to vector<2x512xf32>
    %58 = arith.maximumf %56, %57 : vector<2x512xf32>
    %c0_20 = arith.constant 0 : index
    %c0_21 = arith.constant 0 : index
    %59 = vector.load %arg4[%c0_20, %c0_21] : memref<512x128xf32, #tpu.memory_space<vmem>>, vector<512x128xf32>
    %cst_22 = arith.constant dense<0.000000e+00> : vector<2x128xf32>
    %60 = tpu.matmul %58, %59, %cst_22 {dimension_numbers = #tpu.dot_dimension_numbers<[1], [0], [0], [1], [0, 0, 1, 1], [], []>} : vector<2x512xf32>, vector<512x128xf32>, vector<2x128xf32> -> vector<2x128xf32>
    %c4 = arith.constant 4 : index
    %c0_23 = arith.constant 0 : index
    %61 = vector.load %arg5[%c4, %c0_23] : memref<5x512xf32, #tpu.memory_space<vmem>>, vector<1x128xf32>
    %62 = vector.broadcast %61 : vector<1x128xf32> to vector<2x128xf32>
    %63 = arith.addf %60, %62 : vector<2x128xf32>
    %c0_24 = arith.constant 0 : index
    %c0_25 = arith.constant 0 : index
    %64 = vector.load %arg6[%c0_24, %c0_25] : memref<2x128xf32, #tpu.memory_space<vmem>>, vector<2x128xf32>
    tpu.vector_store %arg6[%c0_24, %c0_25], %63 {strides = array<i32>} : memref<2x128xf32, #tpu.memory_space<vmem>>, vector<2x128xf32>,
    return
  }
}

</mosaic_0001>

<llo_original>
// kernel: qrdqn_forward.1
$region0: #{qrdqn_forward.1}
  #allocation0 [shape = 'u32[]', space=smem, size = 0x4, offset = 0x4, fixed_abs, tag = 'smem constant byte address 0x4 - core index']
  #allocation1 [shape = 'u32[144,128]{1,0:T(1,128)}', space=vmem, size = 0x12000, scoped, tag = 'internal scratch']
  %s0 = inlined_call_operand.vmem [shape: f32[32,576], index: 0, kind: input, shape index: {}]
  %s1 = inlined_call_operand.vmem [shape: f32[576,128], index: 1, kind: input, shape index: {}]
  %s2 = inlined_call_operand.vmem [shape: f32[1088,64], index: 2, kind: input, shape index: {}]
  %s3 = inlined_call_operand.vmem [shape: f32[64,512], index: 3, kind: input, shape index: {}]
  %s4 = inlined_call_operand.vmem [shape: f32[512,128], index: 4, kind: input, shape index: {}]
  %s5 = inlined_call_operand.vmem [shape: f32[5,512], index: 5, kind: input, shape index: {}]
  %s6 = inlined_call_operand.vmem [shape: f32[2,128], index: 6, kind: output, shape index: {}]
  %s7 = sld [smem:[#allocation0]]
  $region34: #{qrdqn_forward.1} parent=0
    _
  %s9 = ssub.s32 1, %s7
  %s10 = scalar_select 0, %s9, %s7
  // Predicated region
  $region2: #{qrdqn_forward.1} parent=0 // pred_check
    _
  $region3: #{qrdqn_forward.1} parent=0 // pred_check_branch
    %12 = sbr.rel (0) target = $region5
  $region4: #{qrdqn_forward.1} parent=0 // pred_region
    _
  $region5: #{qrdqn_forward.1} parent=0 // pred_fallthru
    _
  // Predicated region
  $region6: #{qrdqn_forward.1} parent=0 // pred_check
    _
  $region7: #{qrdqn_forward.1} parent=0 // pred_check_branch
    %14 = sbr.rel (0) target = $region9
  $region8: #{qrdqn_forward.1} parent=0 // pred_region
    _
  $region9: #{qrdqn_forward.1} parent=0 // pred_fallthru
    _
  // Predicated region
  $region10: #{qrdqn_forward.1} parent=0 // pred_check
    _
  $region11: #{qrdqn_forward.1} parent=0 // pred_check_branch
    %16 = sbr.rel (0) target = $region13
  $region12: #{qrdqn_forward.1} parent=0 // pred_region
    _
  $region13: #{qrdqn_forward.1} parent=0 // pred_fallthru
    _
  // Predicated region
  $region14: #{qrdqn_forward.1} parent=0 // pred_check
    _
  $region15: #{qrdqn_forward.1} parent=0 // pred_check_branch
    %18 = sbr.rel (0) target = $region17
  $region16: #{qrdqn_forward.1} parent=0 // pred_region
    _
  $region17: #{qrdqn_forward.1} parent=0 // pred_fallthru
    _
  // Predicated region
  $region18: #{qrdqn_forward.1} parent=0 // pred_check
    _
  $region19: #{qrdqn_forward.1} parent=0 // pred_check_branch
    %20 = sbr.rel (0) target = $region21
  $region20: #{qrdqn_forward.1} parent=0 // pred_region
    _
  $region21: #{qrdqn_forward.1} parent=0 // pred_fallthru
    _
  // Predicated region
  $region22: #{qrdqn_forward.1} parent=0 // pred_check
    _
  $region23: #{qrdqn_forward.1} parent=0 // pred_check_branch
    %22 = sbr.rel (0) target = $region25
  $region24: #{qrdqn_forward.1} parent=0 // pred_region
    _
  $region25: #{qrdqn_forward.1} parent=0 // pred_fallthru
    _
  %v23 = vld [vmem:[%s0] sm:$0xff]
  %v24 = vld [vmem:[%s0 + $0x8] sm:$0xff]
  %v25 = vld [vmem:[%s0 + $0x10] sm:$0xff]
  %v26 = vld [vmem:[%s0 + $0x18] sm:$0xff]
  %v27 = vld [vmem:[%s0 + $0x20] sm:$0xff]
  %v28 = vld [vmem:[%s0 + $0x28] sm:$0xff]
  %v29 = vld [vmem:[%s0 + $0x30] sm:$0xff]
  %v30 = vld [vmem:[%s0 + $0x38] sm:$0xff]
  %v31 = vld [vmem:[%s0 + $0x40] sm:$0xff]
  %v32 = vld [vmem:[%s0 + $0x48] sm:$0xff]
  %v33 = vld [vmem:[%s0 + $0x50] sm:$0xff]
  %v34 = vld [vmem:[%s0 + $0x58] sm:$0xff]
  %v35 = vld [vmem:[%s0 + $0x60] sm:$0xff]
  %v36 = vld [vmem:[%s0 + $0x68] sm:$0xff]
  %v37 = vld [vmem:[%s0 + $0x70] sm:$0xff]
  %v38 = vld [vmem:[%s0 + $0x78] sm:$0xff]
  %v39 = vld [vmem:[%s0 + $0x80] sm:$0xff]
  %v40 = vld [vmem:[%s0 + $0x88] sm:$0xff]
  %v41 = vld [vmem:[%s0 + $0x90] sm:$0xff]
  %v42 = vld [vmem:[%s0 + $0x98] sm:$0xff]
  %v43 = vld [vmem:[%s1] sm:$0xff]
  %v44 = vld [vmem:[%s1 + $0x8] sm:$0xff]
  %v45 = vld [vmem:[%s1 + $0x10] sm:$0xff]
  %v46 = vld [vmem:[%s1 + $0x18] sm:$0xff]
  %v47 = vld [vmem:[%s1 + $0x20] sm:$0xff]
  %v48 = vld [vmem:[%s1 + $0x28] sm:$0xff]
  %v49 = vld [vmem:[%s1 + $0x30] sm:$0xff]
  %v50 = vld [vmem:[%s1 + $0x38] sm:$0xff]
  %v51 = vld [vmem:[%s1 + $0x40] sm:$0xff]
  %v52 = vld [vmem:[%s1 + $0x48] sm:$0xff]
  %v53 = vld [vmem:[%s1 + $0x50] sm:$0xff]
  %v54 = vld [vmem:[%s1 + $0x58] sm:$0xff]
  %v55 = vld [vmem:[%s1 + $0x60] sm:$0xff]
  %v56 = vld [vmem:[%s1 + $0x68] sm:$0xff]
  %v57 = vld [vmem:[%s1 + $0x70] sm:$0xff]
  %v58 = vld [vmem:[%s1 + $0x78] sm:$0xff]
  %v59 = vld [vmem:[%s1 + $0x80] sm:$0xff]
  %v60 = vld [vmem:[%s1 + $0x88] sm:$0xff]
  %v61 = vld [vmem:[%s1 + $0x90] sm:$0xff]
  %v62 = vld [vmem:[%s1 + $0x98] sm:$0xff]
  %v63 = vld [vmem:[%s1 + $0xa0] sm:$0xff]
  %v64 = vld [vmem:[%s1 + $0xa8] sm:$0xff]
  %v65 = vld [vmem:[%s1 + $0xb0] sm:$0xff]
  %v66 = vld [vmem:[%s1 + $0xb8] sm:$0xff]
  %v67 = vld [vmem:[%s1 + $0xc0] sm:$0xff]
  %v68 = vld [vmem:[%s1 + $0xc8] sm:$0xff]
  %v69 = vld [vmem:[%s1 + $0xd0] sm:$0xff]
  %v70 = vld [vmem:[%s1 + $0xd8] sm:$0xff]
  %v71 = vld [vmem:[%s1 + $0xe0] sm:$0xff]
  %v72 = vld [vmem:[%s1 + $0xe8] sm:$0xff]
  %v73 = vld [vmem:[%s1 + $0xf0] sm:$0xff]
  %v74 = vld [vmem:[%s1 + $0xf8] sm:$0xff]
  %v75 = vld [vmem:[%s1 + $0x100] sm:$0xff]
  %v76 = vld [vmem:[%s1 + $0x108] sm:$0xff]
  %v77 = vld [vmem:[%s1 + $0x110] sm:$0xff]
  %v78 = vld [vmem:[%s1 + $0x118] sm:$0xff]
  %v79 = vld [vmem:[%s1 + $0x120] sm:$0xff]
  %v80 = vld [vmem:[%s1 + $0x128] sm:$0xff]
  %v81 = vld [vmem:[%s1 + $0x130] sm:$0xff]
  %v82 = vld [vmem:[%s1 + $0x138] sm:$0xff]
  %v83 = vld [vmem:[%s1 + $0x140] sm:$0xff]
  %v84 = vld [vmem:[%s1 + $0x148] sm:$0xff]
  %v85 = vld [vmem:[%s1 + $0x150] sm:$0xff]
  %v86 = vld [vmem:[%s1 + $0x158] sm:$0xff]
  %v87 = vld [vmem:[%s1 + $0x160] sm:$0xff]
  %v88 = vld [vmem:[%s1 + $0x168] sm:$0xff]
  %v89 = vld [vmem:[%s1 + $0x170] sm:$0xff]
  %v90 = vld [vmem:[%s1 + $0x178] sm:$0xff]
  %v91 = vld [vmem:[%s1 + $0x180] sm:$0xff]
  %v92 = vld [vmem:[%s1 + $0x188] sm:$0xff]
  %v93 = vld [vmem:[%s1 + $0x190] sm:$0xff]
  %v94 = vld [vmem:[%s1 + $0x198] sm:$0xff]
  %v95 = vld [vmem:[%s1 + $0x1a0] sm:$0xff]
  %v96 = vld [vmem:[%s1 + $0x1a8] sm:$0xff]
  %v97 = vld [vmem:[%s1 + $0x1b0] sm:$0xff]
  %v98 = vld [vmem:[%s1 + $0x1b8] sm:$0xff]
  %v99 = vld [vmem:[%s1 + $0x1c0] sm:$0xff]
  %v100 = vld [vmem:[%s1 + $0x1c8] sm:$0xff]
  %v101 = vld [vmem:[%s1 + $0x1d0] sm:$0xff]
  %v102 = vld [vmem:[%s1 + $0x1d8] sm:$0xff]
  %v103 = vld [vmem:[%s1 + $0x1e0] sm:$0xff]
  %v104 = vld [vmem:[%s1 + $0x1e8] sm:$0xff]
  %v105 = vld [vmem:[%s1 + $0x1f0] sm:$0xff]
  %v106 = vld [vmem:[%s1 + $0x1f8] sm:$0xff]
  %v107 = vld [vmem:[%s1 + $0x200] sm:$0xff]
  %v108 = vld [vmem:[%s1 + $0x208] sm:$0xff]
  %v109 = vld [vmem:[%s1 + $0x210] sm:$0xff]
  %v110 = vld [vmem:[%s1 + $0x218] sm:$0xff]
  %v111 = vld [vmem:[%s1 + $0x220] sm:$0xff]
  %v112 = vld [vmem:[%s1 + $0x228] sm:$0xff]
  %v113 = vld [vmem:[%s1 + $0x230] sm:$0xff]
  %v114 = vld [vmem:[%s1 + $0x238] sm:$0xff]
  %v115 = vld [vmem:[%s5] ss:$0 sm:$0xff]
  %vm116 = vcmask 523264
  %v118 = vsel %vm116, %v27, 0
  %v121 = vsel %vm116, %v32, 0
  %v124 = vsel %vm116, %v37, 0
  %v127 = vsel %vm116, %v42, 0
  %129 = vmatprep.subr.mxu0 0.0
  %130 = vmatpush1.msra.mxu0 %v43
  %131 = vmatprep.subr.mxu0 0.0
  %132 = vmatpush1.msra.mxu0 %v44
  %133 = vmatprep.subr.mxu0 0.0
  %134 = vmatpush1.msra.mxu0 %v45
  %135 = vmatprep.subr.mxu0 0.0
  %136 = vmatpush1.msra.mxu0 %v46
  %137 = vmatprep.subr.mxu0 0.0
  %138 = vmatpush1.msra.mxu0 %v47
  %139 = vmatprep.subr.mxu0 0.0
  %140 = vmatpush1.msra.mxu0 %v48
  %141 = vmatprep.subr.mxu0 0.0
  %142 = vmatpush1.msra.mxu0 %v49
  %143 = vmatprep.subr.mxu0 0.0
  %144 = vmatpush1.msra.mxu0 %v50
  %145 = vmatprep.subr.mxu0 0.0
  %146 = vmatpush1.msra.mxu0 %v51
  %147 = vmatprep.subr.mxu0 0.0
  %148 = vmatpush1.msra.mxu0 %v52
  %149 = vmatprep.subr.mxu0 0.0
  %150 = vmatpush1.msra.mxu0 %v53
  %151 = vmatprep.subr.mxu0 0.0
  %152 = vmatpush1.msra.mxu0 %v54
  %153 = vmatprep.subr.mxu0 0.0
  %154 = vmatpush1.msra.mxu0 %v55
  %155 = vmatprep.subr.mxu0 0.0
  %156 = vmatpush1.msra.mxu0 %v56
  %157 = vmatprep.subr.mxu0 0.0
  %158 = vmatpush1.msra.mxu0 %v57
  %159 = vmatprep.subr.mxu0 0.0
  %160 = vmatpush1.msra.mxu0 %v58
  %161 = vmatprep.subr.mxu0 0.0
  %162 = vmatpush1.msra.mxu0 %v59
  %163 = vmatprep.subr.mxu0 0.0
  %164 = vmatpush1.msra.mxu0 %v60
  %165 = vmatprep.subr.mxu0 0.0
  %166 = vmatpush1.msra.mxu0 %v61
  %167 = vmatprep.subr.mxu0 0.0
  %168 = vmatpush1.msra.mxu0 %v62
  %169 = vmatprep.subr.mxu0 0.0
  %170 = vmatpush1.msra.mxu0 %v63
  %171 = vmatprep.subr.mxu0 0.0
  %172 = vmatpush1.msra.mxu0 %v64
  %173 = vmatprep.subr.mxu0 0.0
  %174 = vmatpush1.msra.mxu0 %v65
  %175 = vmatprep.subr.mxu0 0.0
  %176 = vmatpush1.msra.mxu0 %v66
  %177 = vmatprep.subr.mxu0 0.0
  %178 = vmatpush1.msra.mxu0 %v67
  %179 = vmatprep.subr.mxu0 0.0
  %180 = vmatpush1.msra.mxu0 %v68
  %181 = vmatprep.subr.mxu0 0.0
  %182 = vmatpush1.msra.mxu0 %v69
  %183 = vmatprep.subr.mxu0 0.0
  %184 = vmatpush1.msra.mxu0 %v70
  %185 = vmatprep.subr.mxu0 0.0
  %186 = vmatpush1.msra.mxu0 %v71
  %187 = vmatprep.subr.mxu0 0.0
  %188 = vmatpush1.msra.mxu0 %v72
  %189 = vmatprep.subr.mxu0 0.0
  %190 = vmatpush1.msra.mxu0 %v73
  %191 = vmatprep.subr.mxu0 0.0
  %192 = vmatpush1.msra.mxu0 %v74
  %193 = vmatprep.mubr.f32.mxu0 %v24
  %194 = vmatmul.mubr.f32.gmra.mrb[0].mxu0 %v23
  %v195 = vpop.f32.mrb[0].mxu0
  %v196 = vadd.f32 %v115, %v195
  %v197 = vpop.f32.mrb[0].mxu0
  %198 = vmatprep.mubr.f32.mxu0 %v29
  %199 = vmatmul.mubr.f32.gmra.mrb[0].mxu0 %v28
  %v200 = vpop.f32.mrb[0].mxu0
  %v201 = vadd.f32 %v115, %v200
  %v202 = vpop.f32.mrb[0].mxu0
  %203 = vmatprep.mubr.f32.mxu0 %v34
  %204 = vmatmul.mubr.f32.gmra.mrb[0].mxu0 %v33
  %v205 = vpop.f32.mrb[0].mxu0
  %v206 = vadd.f32 %v115, %v205
  %v207 = vpop.f32.mrb[0].mxu0
  %208 = vmatprep.mubr.f32.mxu0 %v39
  %209 = vmatmul.mubr.f32.gmra.mrb[0].mxu0 %v38
  %v210 = vpop.f32.mrb[0].mxu0
  %v211 = vadd.f32 %v115, %v210
  %v212 = vpop.f32.mrb[0].mxu0
  %213 = vdwg.mxu0
  %214 = vmatprep.subr.mxu0 0.0
  %215 = vmatpush1.msra.mxu0 %v75
  %216 = vmatprep.subr.mxu0 0.0
  %217 = vmatpush1.msra.mxu0 %v76
  %218 = vmatprep.subr.mxu0 0.0
  %219 = vmatpush1.msra.mxu0 %v77
  %220 = vmatprep.subr.mxu0 0.0
  %221 = vmatpush1.msra.mxu0 %v78
  %222 = vmatprep.subr.mxu0 0.0
  %223 = vmatpush1.msra.mxu0 %v79
  %224 = vmatprep.subr.mxu0 0.0
  %225 = vmatpush1.msra.mxu0 %v80
  %226 = vmatprep.subr.mxu0 0.0
  %227 = vmatpush1.msra.mxu0 %v81
  %228 = vmatprep.subr.mxu0 0.0
  %229 = vmatpush1.msra.mxu0 %v82
  %230 = vmatprep.subr.mxu0 0.0
  %231 = vmatpush1.msra.mxu0 %v83
  %232 = vmatprep.subr.mxu0 0.0
  %233 = vmatpush1.msra.mxu0 %v84
  %234 = vmatprep.subr.mxu0 0.0
  %235 = vmatpush1.msra.mxu0 %v85
  %236 = vmatprep.subr.mxu0 0.0
  %237 = vmatpush1.msra.mxu0 %v86
  %238 = vmatprep.subr.mxu0 0.0
  %239 = vmatpush1.msra.mxu0 %v87
  %240 = vmatprep.subr.mxu0 0.0
  %241 = vmatpush1.msra.mxu0 %v88
  %242 = vmatprep.subr.mxu0 0.0
  %243 = vmatpush1.msra.mxu0 %v89
  %244 = vmatprep.subr.mxu0 0.0
  %245 = vmatpush1.msra.mxu0 %v90
  %246 = vmatprep.subr.mxu0 0.0
  %247 = vmatpush1.msra.mxu0 %v91
  %248 = vmatprep.subr.mxu0 0.0
  %249 = vmatpush1.msra.mxu0 %v92
  %250 = vmatprep.subr.mxu0 0.0
  %251 = vmatpush1.msra.mxu0 %v93
  %252 = vmatprep.subr.mxu0 0.0
  %253 = vmatpush1.msra.mxu0 %v94
  %254 = vmatprep.subr.mxu0 0.0
  %255 = vmatpush1.msra.mxu0 %v95
  %256 = vmatprep.subr.mxu0 0.0
  %257 = vmatpush1.msra.mxu0 %v96
  %258 = vmatprep.subr.mxu0 0.0
  %259 = vmatpush1.msra.mxu0 %v97
  %260 = vmatprep.subr.mxu0 0.0
  %261 = vmatpush1.msra.mxu0 %v98
  %262 = vmatprep.subr.mxu0 0.0
  %263 = vmatpush1.msra.mxu0 %v99
  %264 = vmatprep.subr.mxu0 0.0
  %265 = vmatpush1.msra.mxu0 %v100
  %266 = vmatprep.subr.mxu0 0.0
  %267 = vmatpush1.msra.mxu0 %v101
  %268 = vmatprep.subr.mxu0 0.0
  %269 = vmatpush1.msra.mxu0 %v102
  %270 = vmatprep.subr.mxu0 0.0
  %271 = vmatpush1.msra.mxu0 %v103
  %272 = vmatprep.subr.mxu0 0.0
  %273 = vmatpush1.msra.mxu0 %v104
  %274 = vmatprep.subr.mxu0 0.0
  %275 = vmatpush1.msra.mxu0 %v105
  %276 = vmatprep.subr.mxu0 0.0
  %277 = vmatpush1.msra.mxu0 %v106
  %278 = vmatprep.mubr.f32.mxu0 %v26
  %279 = vmatmul.mubr.f32.gmra.mrb[0].mxu0 %v25
  %v280 = vpop.f32.mrb[0].mxu0
  %v281 = vadd.f32 %v196, %v280
  %v282 = vpop.f32.mrb[0].mxu0
  %283 = vmatprep.mubr.f32.mxu0 %v31
  %284 = vmatmul.mubr.f32.gmra.mrb[0].mxu0 %v30
  %v285 = vpop.f32.mrb[0].mxu0
  %v286 = vadd.f32 %v201, %v285
  %v287 = vpop.f32.mrb[0].mxu0
  %288 = vmatprep.mubr.f32.mxu0 %v36
  %289 = vmatmul.mubr.f32.gmra.mrb[0].mxu0 %v35
  %v290 = vpop.f32.mrb[0].mxu0
  %v291 = vadd.f32 %v206, %v290
  %v292 = vpop.f32.mrb[0].mxu0
  %293 = vmatprep.mubr.f32.mxu0 %v41
  %294 = vmatmul.mubr.f32.gmra.mrb[0].mxu0 %v40
  %v295 = vpop.f32.mrb[0].mxu0
  %v296 = vadd.f32 %v211, %v295
  %v297 = vpop.f32.mrb[0].mxu0
  %298 = vdwg.mxu0
  %299 = vmatprep.subr.mxu0 0.0
  %300 = vmatpush1.msra.mxu0 %v107
  %301 = vmatprep.subr.mxu0 0.0
  %302 = vmatpush1.msra.mxu0 %v108
  %303 = vmatprep.subr.mxu0 0.0
  %304 = vmatpush1.msra.mxu0 %v109
  %305 = vmatprep.subr.mxu0 0.0
  %306 = vmatpush1.msra.mxu0 %v110
  %307 = vmatprep.subr.mxu0 0.0
  %308 = vmatpush1.msra.mxu0 %v111
  %309 = vmatprep.subr.mxu0 0.0
  %310 = vmatpush1.msra.mxu0 %v112
  %311 = vmatprep.subr.mxu0 0.0
  %312 = vmatpush1.msra.mxu0 %v113
  %313 = vmatprep.subr.mxu0 0.0
  %314 = vmatpush1.msra.mxu0 %v114
  %315 = vmatprep.subr.mxu0 0.0
  %316 = vmatpush1.msra.mxu0 0.0
  %317 = vmatprep.subr.mxu0 0.0
  %318 = vmatpush1.msra.mxu0 0.0
  %319 = vmatprep.subr.mxu0 0.0
  %320 = vmatpush1.msra.mxu0 0.0
  %321 = vmatprep.subr.mxu0 0.0
  %322 = vmatpush1.msra.mxu0 0.0
  %323 = vmatprep.subr.mxu0 0.0
  %324 = vmatpush1.msra.mxu0 0.0
  %325 = vmatprep.subr.mxu0 0.0
  %326 = vmatpush1.msra.mxu0 0.0
  %327 = vmatprep.subr.mxu0 0.0
  %328 = vmatpush1.msra.mxu0 0.0
  %329 = vmatprep.subr.mxu0 0.0
  %330 = vmatpush1.msra.mxu0 0.0
  %331 = vmatprep.subr.mxu0 0.0
  %332 = vmatpush1.msra.mxu0 0.0
  %333 = vmatprep.subr.mxu0 0.0
  %334 = vmatpush1.msra.mxu0 0.0
  %335 = vmatprep.subr.mxu0 0.0
  %336 = vmatpush1.msra.mxu0 0.0
  %337 = vmatprep.subr.mxu0 0.0
  %338 = vmatpush1.msra.mxu0 0.0
  %339 = vmatprep.subr.mxu0 0.0
  %340 = vmatpush1.msra.mxu0 0.0
  %341 = vmatprep.subr.mxu0 0.0
  %342 = vmatpush1.msra.mxu0 0.0
  %343 = vmatprep.subr.mxu0 0.0
  %344 = vmatpush1.msra.mxu0 0.0
  %345 = vmatprep.subr.mxu0 0.0
  %346 = vmatpush1.msra.mxu0 0.0
  %347 = vmatprep.subr.mxu0 0.0
  %348 = vmatpush1.msra.mxu0 0.0
  %349 = vmatprep.subr.mxu0 0.0
  %350 = vmatpush1.msra.mxu0 0.0
  %351 = vmatprep.subr.mxu0 0.0
  %352 = vmatpush1.msra.mxu0 0.0
  %353 = vmatprep.subr.mxu0 0.0
  %354 = vmatpush1.msra.mxu0 0.0
  %355 = vmatprep.subr.mxu0 0.0
  %356 = vmatpush1.msra.mxu0 0.0
  %357 = vmatprep.subr.mxu0 0.0
  %358 = vmatpush1.msra.mxu0 0.0
  %359 = vmatprep.subr.mxu0 0.0
  %360 = vmatpush1.msra.mxu0 0.0
  %361 = vmatprep.subr.mxu0 0.0
  %362 = vmatpush1.msra.mxu0 0.0
  %363 = vmatprep.mubr.f32.mxu0 0.0
  %364 = vmatmul.mubr.f32.gmra.mrb[0].mxu0 %v118
  %v365 = vpop.f32.mrb[0].mxu0
  %v366 = vadd.f32 %v281, %v365
  %v367 = vpop.f32.mrb[0].mxu0
  %368 = vmatprep.mubr.f32.mxu0 0.0
  %369 = vmatmul.mubr.f32.gmra.mrb[0].mxu0 %v121
  %v370 = vpop.f32.mrb[0].mxu0
  %v371 = vadd.f32 %v286, %v370
  %v372 = vpop.f32.mrb[0].mxu0
  %373 = vmatprep.mubr.f32.mxu0 0.0
  %374 = vmatmul.mubr.f32.gmra.mrb[0].mxu0 %v124
  %v375 = vpop.f32.mrb[0].mxu0
  %v376 = vadd.f32 %v291, %v375
  %v377 = vpop.f32.mrb[0].mxu0
  %378 = vmatprep.mubr.f32.mxu0 0.0
  %379 = vmatmul.mubr.f32.gmra.mrb[0].mxu0 %v127
  %v380 = vpop.f32.mrb[0].mxu0
  %v381 = vadd.f32 %v296, %v380
  %v382 = vpop.f32.mrb[0].mxu0
  %383 = vdwg.mxu0
  %v384 = vmax.f32 %v366, 0.0
  %v385 = vmax.f32 %v371, 0.0
  %v386 = vmax.f32 %v376, 0.0
  %v387 = vmax.f32 %v381, 0.0
  %v392 = vcombine.high %v384, %v384
  %v393 = vcombine.high %v385, %v385
  %v394 = vcombine.high %v386, %v386
  %v395 = vcombine.high %v387, %v387
  %v397 = vunpack.c.l.s4 1966171168
  %v398 = vunpack.c.0.s8 %v397
  %v399 = vlaneseq
  %v400 = vshrl.u32 %v399, 7
  %v401 = vsub.s32 %v398, %v400
  %v402 = vrot.slane %v384, %v401
  %v403 = vcombine.high %v402, %v402
  %v405 = vunpack.c.l.s4 1966171168
  %v406 = vunpack.c.0.s8 %v405
  %v407 = vlaneseq
  %v408 = vshrl.u32 %v407, 7
  %v409 = vsub.s32 %v406, %v408
  %v410 = vrot.slane %v402, %v409
  %v412 = vunpack.c.l.s4 1966171168
  %v413 = vunpack.c.0.s8 %v412
  %v414 = vlaneseq
  %v415 = vshrl.u32 %v414, 7
  %v416 = vsub.s32 %v413, %v415
  %v417 = vrot.slane %v403, %v416
  %v418 = vcombine.high %v410, %v410
  %v420 = vunpack.c.l.s4 1966171168
  %v421 = vunpack.c.0.s8 %v420
  %v422 = vlaneseq
  %v423 = vshrl.u32 %v422, 7
  %v424 = vsub.s32 %v421, %v423
  %v425 = vrot.slane %v392, %v424
  %v426 = vcombine.high %v425, %v425
  %v428 = vunpack.c.l.s4 1966171168
  %v429 = vunpack.c.0.s8 %v428
  %v430 = vlaneseq
  %v431 = vshrl.u32 %v430, 7
  %v432 = vsub.s32 %v429, %v431
  %v433 = vrot.slane %v425, %v432
  %v435 = vunpack.c.l.s4 1966171168
  %v436 = vunpack.c.0.s8 %v435
  %v437 = vlaneseq
  %v438 = vshrl.u32 %v437, 7
  %v439 = vsub.s32 %v436, %v438
  %v440 = vrot.slane %v426, %v439
  %v441 = vcombine.high %v433, %v433
  %v443 = vunpack.c.l.s4 1966171168
  %v444 = vunpack.c.0.s8 %v443
  %v445 = vlaneseq
  %v446 = vshrl.u32 %v445, 7
  %v447 = vsub.s32 %v444, %v446
  %v448 = vrot.slane %v385, %v447
  %v449 = vcombine.high %v448, %v448
  %v451 = vunpack.c.l.s4 1966171168
  %v452 = vunpack.c.0.s8 %v451
  %v453 = vlaneseq
  %v454 = vshrl.u32 %v453, 7
  %v455 = vsub.s32 %v452, %v454
  %v456 = vrot.slane %v448, %v455
  %v458 = vunpack.c.l.s4 1966171168
  %v459 = vunpack.c.0.s8 %v458
  %v460 = vlaneseq
  %v461 = vshrl.u32 %v460, 7
  %v462 = vsub.s32 %v459, %v461
  %v463 = vrot.slane %v449, %v462
  %v464 = vcombine.high %v456, %v456
  %v466 = vunpack.c.l.s4 1966171168
  %v467 = vunpack.c.0.s8 %v466
  %v468 = vlaneseq
  %v469 = vshrl.u32 %v468, 7
  %v470 = vsub.s32 %v467, %v469
  %v471 = vrot.slane %v386, %v470
  %v472 = vcombine.high %v471, %v471
  %v474 = vunpack.c.l.s4 1966171168
  %v475 = vunpack.c.0.s8 %v474
  %v476 = vlaneseq
  %v477 = vshrl.u32 %v476, 7
  %v478 = vsub.s32 %v475, %v477
  %v479 = vrot.slane %v471, %v478
  %v481 = vunpack.c.l.s4 1966171168
  %v482 = vunpack.c.0.s8 %v481
  %v483 = vlaneseq
  %v484 = vshrl.u32 %v483, 7
  %v485 = vsub.s32 %v482, %v484
  %v486 = vrot.slane %v472, %v485
  %v487 = vcombine.high %v479, %v479
  %v489 = vunpack.c.l.s4 1966171168
  %v490 = vunpack.c.0.s8 %v489
  %v491 = vlaneseq
  %v492 = vshrl.u32 %v491, 7
  %v493 = vsub.s32 %v490, %v492
  %v494 = vrot.slane %v394, %v493
  %v495 = vcombine.high %v494, %v494
  %v497 = vunpack.c.l.s4 1966171168
  %v498 = vunpack.c.0.s8 %v497
  %v499 = vlaneseq
  %v500 = vshrl.u32 %v499, 7
  %v501 = vsub.s32 %v498, %v500
  %v502 = vrot.slane %v494, %v501
  %v504 = vunpack.c.l.s4 1966171168
  %v505 = vunpack.c.0.s8 %v504
  %v506 = vlaneseq
  %v507 = vshrl.u32 %v506, 7
  %v508 = vsub.s32 %v505, %v507
  %v509 = vrot.slane %v495, %v508
  %v510 = vcombine.high %v502, %v502
  %v512 = vunpack.c.l.s4 1966171168
  %v513 = vunpack.c.0.s8 %v512
  %v514 = vlaneseq
  %v515 = vshrl.u32 %v514, 7
  %v516 = vsub.s32 %v513, %v515
  %v517 = vrot.slane %v387, %v516
  %v518 = vcombine.high %v517, %v517
  %v520 = vunpack.c.l.s4 1966171168
  %v521 = vunpack.c.0.s8 %v520
  %v522 = vlaneseq
  %v523 = vshrl.u32 %v522, 7
  %v524 = vsub.s32 %v521, %v523
  %v525 = vrot.slane %v517, %v524
  %v527 = vunpack.c.l.s4 1966171168
  %v528 = vunpack.c.0.s8 %v527
  %v529 = vlaneseq
  %v530 = vshrl.u32 %v529, 7
  %v531 = vsub.s32 %v528, %v530
  %v532 = vrot.slane %v518, %v531
  %v533 = vcombine.high %v525, %v525
  %v534 = vcombine.high %v417, %v417
  %v535 = vcombine.high %v440, %v440
  %v536 = vcombine.high %v463, %v463
  %v537 = vcombine.high %v486, %v486
  %v538 = vcombine.high %v509, %v509
  %v539 = vcombine.high %v532, %v532
  %v541 = vunpack.c.l.s4 1966171168
  %v542 = vunpack.c.0.s8 %v541
  %v543 = vlaneseq
  %v544 = vshrl.u32 %v543, 7
  %v545 = vsub.s32 %v542, %v544
  %v546 = vrot.slane %v393, %v545
  %v547 = vcombine.high %v546, %v546
  %v549 = vunpack.c.l.s4 1966171168
  %v550 = vunpack.c.0.s8 %v549
  %v551 = vlaneseq
  %v552 = vshrl.u32 %v551, 7
  %v553 = vsub.s32 %v550, %v552
  %v554 = vrot.slane %v546, %v553
  %v556 = vunpack.c.l.s4 1966171168
  %v557 = vunpack.c.0.s8 %v556
  %v558 = vlaneseq
  %v559 = vshrl.u32 %v558, 7
  %v560 = vsub.s32 %v557, %v559
  %v561 = vrot.slane %v547, %v560
  %v562 = vcombine.high %v554, %v554
  %v564 = vunpack.c.l.s4 1966171168
  %v565 = vunpack.c.0.s8 %v564
  %v566 = vlaneseq
  %v567 = vshrl.u32 %v566, 7
  %v568 = vsub.s32 %v565, %v567
  %v569 = vrot.slane %v395, %v568
  %v570 = vcombine.high %v569, %v569
  %v572 = vunpack.c.l.s4 1966171168
  %v573 = vunpack.c.0.s8 %v572
  %v574 = vlaneseq
  %v575 = vshrl.u32 %v574, 7
  %v576 = vsub.s32 %v573, %v575
  %v577 = vrot.slane %v569, %v576
  %v579 = vunpack.c.l.s4 1966171168
  %v580 = vunpack.c.0.s8 %v579
  %v581 = vlaneseq
  %v582 = vshrl.u32 %v581, 7
  %v583 = vsub.s32 %v580, %v582
  %v584 = vrot.slane %v570, %v583
  %v585 = vcombine.high %v577, %v577
  %v586 = vcombine.high %v561, %v561
  %v587 = vcombine.high %v584, %v584
  %v588 = vcombine.low %v410, %v417
  %v589 = vcombine.low %v418, %v433
  %v590 = vcombine.low %v440, %v441
  %v591 = vcombine.low %v456, %v463
  %v593 = vunpack.c.l.s4 1966171168
  %v594 = vunpack.c.0.s8 %v593
  %v595 = vlaneseq
  %v596 = vshrl.u32 %v595, 7
  %v597 = vsub.s32 %v594, %v596
  %v598 = vrot.slane %v588, %v597
  %v600 = vunpack.c.l.s4 1966171168
  %v601 = vunpack.c.0.s8 %v600
  %v602 = vlaneseq
  %v603 = vshrl.u32 %v602, 7
  %v604 = vsub.s32 %v601, %v603
  %v605 = vrot.slane %v589, %v604
  %v607 = vunpack.c.l.s4 1966171168
  %v608 = vunpack.c.0.s8 %v607
  %v609 = vlaneseq
  %v610 = vshrl.u32 %v609, 7
  %v611 = vsub.s32 %v608, %v610
  %v612 = vrot.slane %v590, %v611
  %v614 = vunpack.c.l.s4 1966171168
  %v615 = vunpack.c.0.s8 %v614
  %v616 = vlaneseq
  %v617 = vshrl.u32 %v616, 7
  %v618 = vsub.s32 %v615, %v617
  %v619 = vrot.slane %v591, %v618
  %v620 = vcombine.low %v598, %v605
  %v621 = vcombine.low %v612, %v619
  %v623 = vunpack.c.l.s4 1966171168
  %v624 = vunpack.c.0.s8 %v623
  %v625 = vlaneseq
  %v626 = vshrl.u32 %v625, 7
  %v627 = vsub.s32 %v624, %v626
  %v628 = vrot.slane %v620, %v627
  %v630 = vunpack.c.l.s4 1966171168
  %v631 = vunpack.c.0.s8 %v630
  %v632 = vlaneseq
  %v633 = vshrl.u32 %v632, 7
  %v634 = vsub.s32 %v631, %v633
  %v635 = vrot.slane %v621, %v634
  %v636 = vcombine.low %v628, %v635
  %v637 = vcombine.low %v464, %v479
  %v638 = vcombine.low %v486, %v487
  %v639 = vcombine.low %v502, %v509
  %v640 = vcombine.low %v510, %v525
  %v642 = vunpack.c.l.s4 1966171168
  %v643 = vunpack.c.0.s8 %v642
  %v644 = vlaneseq
  %v645 = vshrl.u32 %v644, 7
  %v646 = vsub.s32 %v643, %v645
  %v647 = vrot.slane %v637, %v646
  %v649 = vunpack.c.l.s4 1966171168
  %v650 = vunpack.c.0.s8 %v649
  %v651 = vlaneseq
  %v652 = vshrl.u32 %v651, 7
  %v653 = vsub.s32 %v650, %v652
  %v654 = vrot.slane %v638, %v653
  %v656 = vunpack.c.l.s4 1966171168
  %v657 = vunpack.c.0.s8 %v656
  %v658 = vlaneseq
  %v659 = vshrl.u32 %v658, 7
  %v660 = vsub.s32 %v657, %v659
  %v661 = vrot.slane %v639, %v660
  %v663 = vunpack.c.l.s4 1966171168
  %v664 = vunpack.c.0.s8 %v663
  %v665 = vlaneseq
  %v666 = vshrl.u32 %v665, 7
  %v667 = vsub.s32 %v664, %v666
  %v668 = vrot.slane %v640, %v667
  %v669 = vcombine.low %v647, %v654
  %v670 = vcombine.low %v661, %v668
  %v672 = vunpack.c.l.s4 1966171168
  %v673 = vunpack.c.0.s8 %v672
  %v674 = vlaneseq
  %v675 = vshrl.u32 %v674, 7
  %v676 = vsub.s32 %v673, %v675
  %v677 = vrot.slane %v669, %v676
  %v679 = vunpack.c.l.s4 1966171168
  %v680 = vunpack.c.0.s8 %v679
  %v681 = vlaneseq
  %v682 = vshrl.u32 %v681, 7
  %v683 = vsub.s32 %v680, %v682
  %v684 = vrot.slane %v670, %v683
  %v685 = vcombine.low %v677, %v684
  %v686 = vcombine.low %v532, %v533
  %v688 = vunpack.c.l.s4 1966171168
  %v689 = vunpack.c.0.s8 %v688
  %v690 = vlaneseq
  %v691 = vshrl.u32 %v690, 7
  %v692 = vsub.s32 %v689, %v691
  %v693 = vrot.slane %v686, %v692
  %v695 = vunpack.c.l.s4 1966171168
  %v696 = vunpack.c.0.s8 %v695
  %v697 = vlaneseq
  %v698 = vshrl.u32 %v697, 7
  %v699 = vsub.s32 %v696, %v698
  %v700 = vrot.slane %v693, %v699
  %v704 = vcombine.low %v417, %v418
  %v705 = vcombine.low %v534, %v440
  %v706 = vcombine.low %v441, %v535
  %v707 = vcombine.low %v463, %v464
  %v709 = vunpack.c.l.s4 1966171168
  %v710 = vunpack.c.0.s8 %v709
  %v711 = vlaneseq
  %v712 = vshrl.u32 %v711, 7
  %v713 = vsub.s32 %v710, %v712
  %v714 = vrot.slane %v704, %v713
  %v716 = vunpack.c.l.s4 1966171168
  %v717 = vunpack.c.0.s8 %v716
  %v718 = vlaneseq
  %v719 = vshrl.u32 %v718, 7
  %v720 = vsub.s32 %v717, %v719
  %v721 = vrot.slane %v705, %v720
  %v723 = vunpack.c.l.s4 1966171168
  %v724 = vunpack.c.0.s8 %v723
  %v725 = vlaneseq
  %v726 = vshrl.u32 %v725, 7
  %v727 = vsub.s32 %v724, %v726
  %v728 = vrot.slane %v706, %v727
  %v730 = vunpack.c.l.s4 1966171168
  %v731 = vunpack.c.0.s8 %v730
  %v732 = vlaneseq
  %v733 = vshrl.u32 %v732, 7
  %v734 = vsub.s32 %v731, %v733
  %v735 = vrot.slane %v707, %v734
  %v736 = vcombine.low %v714, %v721
  %v737 = vcombine.low %v728, %v735
  %v739 = vunpack.c.l.s4 1966171168
  %v740 = vunpack.c.0.s8 %v739
  %v741 = vlaneseq
  %v742 = vshrl.u32 %v741, 7
  %v743 = vsub.s32 %v740, %v742
  %v744 = vrot.slane %v736, %v743
  %v746 = vunpack.c.l.s4 1966171168
  %v747 = vunpack.c.0.s8 %v746
  %v748 = vlaneseq
  %v749 = vshrl.u32 %v748, 7
  %v750 = vsub.s32 %v747, %v749
  %v751 = vrot.slane %v737, %v750
  %v752 = vcombine.low %v744, %v751
  %v753 = vcombine.low %v536, %v486
  %v754 = vcombine.low %v487, %v537
  %v755 = vcombine.low %v509, %v510
  %v756 = vcombine.low %v538, %v532
  %v758 = vunpack.c.l.s4 1966171168
  %v759 = vunpack.c.0.s8 %v758
  %v760 = vlaneseq
  %v761 = vshrl.u32 %v760, 7
  %v762 = vsub.s32 %v759, %v761
  %v763 = vrot.slane %v753, %v762
  %v765 = vunpack.c.l.s4 1966171168
  %v766 = vunpack.c.0.s8 %v765
  %v767 = vlaneseq
  %v768 = vshrl.u32 %v767, 7
  %v769 = vsub.s32 %v766, %v768
  %v770 = vrot.slane %v754, %v769
  %v772 = vunpack.c.l.s4 1966171168
  %v773 = vunpack.c.0.s8 %v772
  %v774 = vlaneseq
  %v775 = vshrl.u32 %v774, 7
  %v776 = vsub.s32 %v773, %v775
  %v777 = vrot.slane %v755, %v776
  %v779 = vunpack.c.l.s4 1966171168
  %v780 = vunpack.c.0.s8 %v779
  %v781 = vlaneseq
  %v782 = vshrl.u32 %v781, 7
  %v783 = vsub.s32 %v780, %v782
  %v784 = vrot.slane %v756, %v783
  %v785 = vcombine.low %v763, %v770
  %v786 = vcombine.low %v777, %v784
  %v788 = vunpack.c.l.s4 1966171168
  %v789 = vunpack.c.0.s8 %v788
  %v790 = vlaneseq
  %v791 = vshrl.u32 %v790, 7
  %v792 = vsub.s32 %v789, %v791
  %v793 = vrot.slane %v785, %v792
  %v795 = vunpack.c.l.s4 1966171168
  %v796 = vunpack.c.0.s8 %v795
  %v797 = vlaneseq
  %v798 = vshrl.u32 %v797, 7
  %v799 = vsub.s32 %v796, %v798
  %v800 = vrot.slane %v786, %v799
  %v801 = vcombine.low %v793, %v800
  %v802 = vcombine.low %v533, %v539
  %v804 = vunpack.c.l.s4 1966171168
  %v805 = vunpack.c.0.s8 %v804
  %v806 = vlaneseq
  %v807 = vshrl.u32 %v806, 7
  %v808 = vsub.s32 %v805, %v807
  %v809 = vrot.slane %v802, %v808
  %v811 = vunpack.c.l.s4 1966171168
  %v812 = vunpack.c.0.s8 %v811
  %v813 = vlaneseq
  %v814 = vshrl.u32 %v813, 7
  %v815 = vsub.s32 %v812, %v814
  %v816 = vrot.slane %v809, %v815
  %v820 = vcombine.low %v433, %v440
  %v821 = vcombine.low %v441, %v456
  %v822 = vcombine.low %v554, %v561
  %v824 = vunpack.c.l.s4 1966171168
  %v825 = vunpack.c.0.s8 %v824
  %v826 = vlaneseq
  %v827 = vshrl.u32 %v826, 7
  %v828 = vsub.s32 %v825, %v827
  %v829 = vrot.slane %v820, %v828
  %v831 = vunpack.c.l.s4 1966171168
  %v832 = vunpack.c.0.s8 %v831
  %v833 = vlaneseq
  %v834 = vshrl.u32 %v833, 7
  %v835 = vsub.s32 %v832, %v834
  %v836 = vrot.slane %v821, %v835
  %v838 = vunpack.c.l.s4 1966171168
  %v839 = vunpack.c.0.s8 %v838
  %v840 = vlaneseq
  %v841 = vshrl.u32 %v840, 7
  %v842 = vsub.s32 %v839, %v841
  %v843 = vrot.slane %v822, %v842
  %v844 = vcombine.low %v829, %v836
  %v845 = vcombine.low %v735, %v843
  %v847 = vunpack.c.l.s4 1966171168
  %v848 = vunpack.c.0.s8 %v847
  %v849 = vlaneseq
  %v850 = vshrl.u32 %v849, 7
  %v851 = vsub.s32 %v848, %v850
  %v852 = vrot.slane %v844, %v851
  %v854 = vunpack.c.l.s4 1966171168
  %v855 = vunpack.c.0.s8 %v854
  %v856 = vlaneseq
  %v857 = vshrl.u32 %v856, 7
  %v858 = vsub.s32 %v855, %v857
  %v859 = vrot.slane %v845, %v858
  %v860 = vcombine.low %v852, %v859
  %v861 = vcombine.low %v562, %v502
  %v862 = vcombine.low %v525, %v532
  %v863 = vcombine.low %v533, %v577
  %v865 = vunpack.c.l.s4 1966171168
  %v866 = vunpack.c.0.s8 %v865
  %v867 = vlaneseq
  %v868 = vshrl.u32 %v867, 7
  %v869 = vsub.s32 %v866, %v868
  %v870 = vrot.slane %v861, %v869
  %v872 = vunpack.c.l.s4 1966171168
  %v873 = vunpack.c.0.s8 %v872
  %v874 = vlaneseq
  %v875 = vshrl.u32 %v874, 7
  %v876 = vsub.s32 %v873, %v875
  %v877 = vrot.slane %v862, %v876
  %v879 = vunpack.c.l.s4 1966171168
  %v880 = vunpack.c.0.s8 %v879
  %v881 = vlaneseq
  %v882 = vshrl.u32 %v881, 7
  %v883 = vsub.s32 %v880, %v882
  %v884 = vrot.slane %v863, %v883
  %v885 = vcombine.low %v870, %v777
  %v886 = vcombine.low %v877, %v884
  %v888 = vunpack.c.l.s4 1966171168
  %v889 = vunpack.c.0.s8 %v888
  %v890 = vlaneseq
  %v891 = vshrl.u32 %v890, 7
  %v892 = vsub.s32 %v889, %v891
  %v893 = vrot.slane %v885, %v892
  %v895 = vunpack.c.l.s4 1966171168
  %v896 = vunpack.c.0.s8 %v895
  %v897 = vlaneseq
  %v898 = vshrl.u32 %v897, 7
  %v899 = vsub.s32 %v896, %v898
  %v900 = vrot.slane %v886, %v899
  %v901 = vcombine.low %v893, %v900
  %v902 = vcombine.low %v584, %v585
  %v904 = vunpack.c.l.s4 1966171168
  %v905 = vunpack.c.0.s8 %v904
  %v906 = vlaneseq
  %v907 = vshrl.u32 %v906, 7
  %v908 = vsub.s32 %v905, %v907
  %v909 = vrot.slane %v902, %v908
  %v911 = vunpack.c.l.s4 1966171168
  %v912 = vunpack.c.0.s8 %v911
  %v913 = vlaneseq
  %v914 = vshrl.u32 %v913, 7
  %v915 = vsub.s32 %v912, %v914
  %v916 = vrot.slane %v909, %v915
  %v920 = vcombine.low %v535, %v463
  %v921 = vcombine.low %v464, %v536
  %v922 = vcombine.low %v561, %v562
  %v924 = vunpack.c.l.s4 1966171168
  %v925 = vunpack.c.0.s8 %v924
  %v926 = vlaneseq
  %v927 = vshrl.u32 %v926, 7
  %v928 = vsub.s32 %v925, %v927
  %v929 = vrot.slane %v920, %v928
  %v931 = vunpack.c.l.s4 1966171168
  %v932 = vunpack.c.0.s8 %v931
  %v933 = vlaneseq
  %v934 = vshrl.u32 %v933, 7
  %v935 = vsub.s32 %v932, %v934
  %v936 = vrot.slane %v921, %v935
  %v938 = vunpack.c.l.s4 1966171168
  %v939 = vunpack.c.0.s8 %v938
  %v940 = vlaneseq
  %v941 = vshrl.u32 %v940, 7
  %v942 = vsub.s32 %v939, %v941
  %v943 = vrot.slane %v922, %v942
  %v944 = vcombine.low %v612, %v929
  %v945 = vcombine.low %v936, %v943
  %v947 = vunpack.c.l.s4 1966171168
  %v948 = vunpack.c.0.s8 %v947
  %v949 = vlaneseq
  %v950 = vshrl.u32 %v949, 7
  %v951 = vsub.s32 %v948, %v950
  %v952 = vrot.slane %v944, %v951
  %v954 = vunpack.c.l.s4 1966171168
  %v955 = vunpack.c.0.s8 %v954
  %v956 = vlaneseq
  %v957 = vshrl.u32 %v956, 7
  %v958 = vsub.s32 %v955, %v957
  %v959 = vrot.slane %v945, %v958
  %v960 = vcombine.low %v952, %v959
  %v961 = vcombine.low %v586, %v509
  %v962 = vcombine.low %v510, %v538
  %v963 = vcombine.low %v539, %v584
  %v965 = vunpack.c.l.s4 1966171168
  %v966 = vunpack.c.0.s8 %v965
  %v967 = vlaneseq
  %v968 = vshrl.u32 %v967, 7
  %v969 = vsub.s32 %v966, %v968
  %v970 = vrot.slane %v961, %v969
  %v972 = vunpack.c.l.s4 1966171168
  %v973 = vunpack.c.0.s8 %v972
  %v974 = vlaneseq
  %v975 = vshrl.u32 %v974, 7
  %v976 = vsub.s32 %v973, %v975
  %v977 = vrot.slane %v962, %v976
  %v979 = vunpack.c.l.s4 1966171168
  %v980 = vunpack.c.0.s8 %v979
  %v981 = vlaneseq
  %v982 = vshrl.u32 %v981, 7
  %v983 = vsub.s32 %v980, %v982
  %v984 = vrot.slane %v963, %v983
  %v985 = vcombine.low %v970, %v977
  %v986 = vcombine.low %v693, %v984
  %v988 = vunpack.c.l.s4 1966171168
  %v989 = vunpack.c.0.s8 %v988
  %v990 = vlaneseq
  %v991 = vshrl.u32 %v990, 7
  %v992 = vsub.s32 %v989, %v991
  %v993 = vrot.slane %v985, %v992
  %v995 = vunpack.c.l.s4 1966171168
  %v996 = vunpack.c.0.s8 %v995
  %v997 = vlaneseq
  %v998 = vshrl.u32 %v997, 7
  %v999 = vsub.s32 %v996, %v998
  %v1000 = vrot.slane %v986, %v999
  %v1001 = vcombine.low %v993, %v1000
  %v1002 = vcombine.low %v585, %v587
  %v1004 = vunpack.c.l.s4 1966171168
  %v1005 = vunpack.c.0.s8 %v1004
  %v1006 = vlaneseq
  %v1007 = vshrl.u32 %v1006, 7
  %v1008 = vsub.s32 %v1005, %v1007
  %v1009 = vrot.slane %v1002, %v1008
  %v1011 = vunpack.c.l.s4 1966171168
  %v1012 = vunpack.c.0.s8 %v1011
  %v1013 = vlaneseq
  %v1014 = vshrl.u32 %v1013, 7
  %v1015 = vsub.s32 %v1012, %v1014
  %v1016 = vrot.slane %v1009, %v1015
  %v1020 = vld [vmem:[%s2] sm:$0xff]
  %v1021 = vld [vmem:[%s2 + $0x8] sm:$0xff]
  %v1022 = vld [vmem:[%s2 + $0x10] sm:$0xff]
  %v1023 = vld [vmem:[%s2 + $0x18] sm:$0xff]
  %v1024 = vld [vmem:[%s2 + $0x20] sm:$0xff]
  %v1025 = vld [vmem:[%s2 + $0x28] sm:$0xff]
  %v1026 = vld [vmem:[%s2 + $0x30] sm:$0xff]
  %v1027 = vld [vmem:[%s2 + $0x38] sm:$0xff]
  %v1028 = vld [vmem:[%s2 + $0x40] sm:$0xff]
  %v1029 = vld [vmem:[%s2 + $0x48] sm:$0xff]
  %v1030 = vld [vmem:[%s2 + $0x50] sm:$0xff]
  %v1031 = vld [vmem:[%s2 + $0x58] sm:$0xff]
  %v1032 = vld [vmem:[%s2 + $0x60] sm:$0xff]
  %v1033 = vld [vmem:[%s2 + $0x68] sm:$0xff]
  %v1034 = vld [vmem:[%s2 + $0x70] sm:$0xff]
  %v1035 = vld [vmem:[%s2 + $0x78] sm:$0xff]
  %v1036 = vld [vmem:[%s2 + $0x80] sm:$0xff]
  %v1037 = vld [vmem:[%s2 + $0x88] sm:$0xff]
  %v1038 = vld [vmem:[%s2 + $0x90] sm:$0xff]
  %v1039 = vld [vmem:[%s2 + $0x98] sm:$0xff]
  %v1040 = vld [vmem:[%s2 + $0xa0] sm:$0xff]
  %v1041 = vld [vmem:[%s2 + $0xa8] sm:$0xff]
  %v1042 = vld [vmem:[%s2 + $0xb0] sm:$0xff]
  %v1043 = vld [vmem:[%s2 + $0xb8] sm:$0xff]
  %v1044 = vld [vmem:[%s2 + $0xc0] sm:$0xff]
  %v1045 = vld [vmem:[%s2 + $0xc8] sm:$0xff]
  %v1046 = vld [vmem:[%s2 + $0xd0] sm:$0xff]
  %v1047 = vld [vmem:[%s2 + $0xd8] sm:$0xff]
  %v1048 = vld [vmem:[%s2 + $0xe0] sm:$0xff]
  %v1049 = vld [vmem:[%s2 + $0xe8] sm:$0xff]
  %v1050 = vld [vmem:[%s2 + $0xf0] sm:$0xff]
  %v1051 = vld [vmem:[%s2 + $0xf8] sm:$0xff]
  %v1052 = vld [vmem:[%s2 + $0x100] sm:$0xff]
  %v1053 = vld [vmem:[%s2 + $0x108] sm:$0xff]
  %v1054 = vld [vmem:[%s2 + $0x110] sm:$0xff]
  %v1055 = vld [vmem:[%s2 + $0x118] sm:$0xff]
  %v1056 = vld [vmem:[%s2 + $0x120] sm:$0xff]
  %v1057 = vld [vmem:[%s2 + $0x128] sm:$0xff]
  %v1058 = vld [vmem:[%s2 + $0x130] sm:$0xff]
  %v1059 = vld [vmem:[%s2 + $0x138] sm:$0xff]
  %v1060 = vld [vmem:[%s2 + $0x140] sm:$0xff]
  %v1061 = vld [vmem:[%s2 + $0x148] sm:$0xff]
  %v1062 = vld [vmem:[%s2 + $0x150] sm:$0xff]
  %v1063 = vld [vmem:[%s2 + $0x158] sm:$0xff]
  %v1064 = vld [vmem:[%s2 + $0x160] sm:$0xff]
  %v1065 = vld [vmem:[%s2 + $0x168] sm:$0xff]
  %v1066 = vld [vmem:[%s2 + $0x170] sm:$0xff]
  %v1067 = vld [vmem:[%s2 + $0x178] sm:$0xff]
  %v1068 = vld [vmem:[%s2 + $0x180] sm:$0xff]
  %v1069 = vld [vmem:[%s2 + $0x188] sm:$0xff]
  %v1070 = vld [vmem:[%s2 + $0x190] sm:$0xff]
  %v1071 = vld [vmem:[%s2 + $0x198] sm:$0xff]
  %v1072 = vld [vmem:[%s2 + $0x1a0] sm:$0xff]
  %v1073 = vld [vmem:[%s2 + $0x1a8] sm:$0xff]
  %v1074 = vld [vmem:[%s2 + $0x1b0] sm:$0xff]
  %v1075 = vld [vmem:[%s2 + $0x1b8] sm:$0xff]
  %v1076 = vld [vmem:[%s2 + $0x1c0] sm:$0xff]
  %v1077 = vld [vmem:[%s2 + $0x1c8] sm:$0xff]
  %v1078 = vld [vmem:[%s2 + $0x1d0] sm:$0xff]
  %v1079 = vld [vmem:[%s2 + $0x1d8] sm:$0xff]
  %v1080 = vld [vmem:[%s2 + $0x1e0] sm:$0xff]
  %v1081 = vld [vmem:[%s2 + $0x1e8] sm:$0xff]
  %v1082 = vld [vmem:[%s2 + $0x1f0] sm:$0xff]
  %v1083 = vld [vmem:[%s2 + $0x1f8] sm:$0xff]
  %v1084 = vld [vmem:[%s5 + $0x1] ss:$0 sm:$0xff]
  %1085 = vmatprep.subr.mxu0 0.0
  %1086 = vmatpush1.msra.mxu0 %v1020
  %1087 = vmatprep.subr.mxu0 0.0
  %1088 = vmatpush1.msra.mxu0 %v1021
  %1089 = vmatprep.subr.mxu0 0.0
  %1090 = vmatpush1.msra.mxu0 %v1022
  %1091 = vmatprep.subr.mxu0 0.0
  %1092 = vmatpush1.msra.mxu0 %v1023
  %1093 = vmatprep.subr.mxu0 0.0
  %1094 = vmatpush1.msra.mxu0 %v1024
  %1095 = vmatprep.subr.mxu0 0.0
  %1096 = vmatpush1.msra.mxu0 %v1025
  %1097 = vmatprep.subr.mxu0 0.0
  %1098 = vmatpush1.msra.mxu0 %v1026
  %1099 = vmatprep.subr.mxu0 0.0
  %1100 = vmatpush1.msra.mxu0 %v1027
  %1101 = vmatprep.subr.mxu0 0.0
  %1102 = vmatpush1.msra.mxu0 %v1028
  %1103 = vmatprep.subr.mxu0 0.0
  %1104 = vmatpush1.msra.mxu0 %v1029
  %1105 = vmatprep.subr.mxu0 0.0
  %1106 = vmatpush1.msra.mxu0 %v1030
  %1107 = vmatprep.subr.mxu0 0.0
  %1108 = vmatpush1.msra.mxu0 %v1031
  %1109 = vmatprep.subr.mxu0 0.0
  %1110 = vmatpush1.msra.mxu0 %v1032
  %1111 = vmatprep.subr.mxu0 0.0
  %1112 = vmatpush1.msra.mxu0 %v1033
  %1113 = vmatprep.subr.mxu0 0.0
  %1114 = vmatpush1.msra.mxu0 %v1034
  %1115 = vmatprep.subr.mxu0 0.0
  %1116 = vmatpush1.msra.mxu0 %v1035
  %1117 = vmatprep.subr.mxu0 0.0
  %1118 = vmatpush1.msra.mxu0 %v1036
  %1119 = vmatprep.subr.mxu0 0.0
  %1120 = vmatpush1.msra.mxu0 %v1037
  %1121 = vmatprep.subr.mxu0 0.0
  %1122 = vmatpush1.msra.mxu0 %v1038
  %1123 = vmatprep.subr.mxu0 0.0
  %1124 = vmatpush1.msra.mxu0 %v1039
  %1125 = vmatprep.subr.mxu0 0.0
  %1126 = vmatpush1.msra.mxu0 %v1040
  %1127 = vmatprep.subr.mxu0 0.0
  %1128 = vmatpush1.msra.mxu0 %v1041
  %1129 = vmatprep.subr.mxu0 0.0
  %1130 = vmatpush1.msra.mxu0 %v1042
  %1131 = vmatprep.subr.mxu0 0.0
  %1132 = vmatpush1.msra.mxu0 %v1043
  %1133 = vmatprep.subr.mxu0 0.0
  %1134 = vmatpush1.msra.mxu0 %v1044
  %1135 = vmatprep.subr.mxu0 0.0
  %1136 = vmatpush1.msra.mxu0 %v1045
  %1137 = vmatprep.subr.mxu0 0.0
  %1138 = vmatpush1.msra.mxu0 %v1046
  %1139 = vmatprep.subr.mxu0 0.0
  %1140 = vmatpush1.msra.mxu0 %v1047
  %1141 = vmatprep.subr.mxu0 0.0
  %1142 = vmatpush1.msra.mxu0 %v1048
  %1143 = vmatprep.subr.mxu0 0.0
  %1144 = vmatpush1.msra.mxu0 %v1049
  %1145 = vmatprep.subr.mxu0 0.0
  %1146 = vmatpush1.msra.mxu0 %v1050
  %1147 = vmatprep.subr.mxu0 0.0
  %1148 = vmatpush1.msra.mxu0 %v1051
  %1149 = vmatprep.mubr.f32.mxu0 %v752
  %1150 = vmatmul.mubr.f32.gmra.mrb[0].mxu0 %v636
  %v1151 = vpop.f32.mrb[0].mxu0
  %v1152 = vadd.f32 %v1084, %v1151
  %v1153 = vpop.f32.mrb[0].mxu0
  %1154 = vmatprep.mubr.f32.mxu0 %v801
  %1155 = vmatmul.mubr.f32.gmra.mrb[0].mxu0 %v685
  %v1156 = vpop.f32.mrb[0].mxu0
  %v1157 = vadd.f32 %v1084, %v1156
  %v1158 = vpop.f32.mrb[0].mxu0
  %1159 = vmatprep.mubr.f32.mxu0 %v816
  %1160 = vmatmul.mubr.f32.gmra.mrb[0].mxu0 %v700
  %v1161 = vpop.f32.mrb[0].mxu0
  %v1162 = vadd.f32 %v1084, %v1161
  %v1163 = vpop.f32.mrb[0].mxu0
  %1164 = vdwg.mxu0
  %1165 = vmatprep.subr.mxu0 0.0
  %1166 = vmatpush1.msra.mxu0 %v1052
  %1167 = vmatprep.subr.mxu0 0.0
  %1168 = vmatpush1.msra.mxu0 %v1053
  %1169 = vmatprep.subr.mxu0 0.0
  %1170 = vmatpush1.msra.mxu0 %v1054
  %1171 = vmatprep.subr.mxu0 0.0
  %1172 = vmatpush1.msra.mxu0 %v1055
  %1173 = vmatprep.subr.mxu0 0.0
  %1174 = vmatpush1.msra.mxu0 %v1056
  %1175 = vmatprep.subr.mxu0 0.0
  %1176 = vmatpush1.msra.mxu0 %v1057
  %1177 = vmatprep.subr.mxu0 0.0
  %1178 = vmatpush1.msra.mxu0 %v1058
  %1179 = vmatprep.subr.mxu0 0.0
  %1180 = vmatpush1.msra.mxu0 %v1059
  %1181 = vmatprep.subr.mxu0 0.0
  %1182 = vmatpush1.msra.mxu0 %v1060
  %1183 = vmatprep.subr.mxu0 0.0
  %1184 = vmatpush1.msra.mxu0 %v1061
  %1185 = vmatprep.subr.mxu0 0.0
  %1186 = vmatpush1.msra.mxu0 %v1062
  %1187 = vmatprep.subr.mxu0 0.0
  %1188 = vmatpush1.msra.mxu0 %v1063
  %1189 = vmatprep.subr.mxu0 0.0
  %1190 = vmatpush1.msra.mxu0 %v1064
  %1191 = vmatprep.subr.mxu0 0.0
  %1192 = vmatpush1.msra.mxu0 %v1065
  %1193 = vmatprep.subr.mxu0 0.0
  %1194 = vmatpush1.msra.mxu0 %v1066
  %1195 = vmatprep.subr.mxu0 0.0
  %1196 = vmatpush1.msra.mxu0 %v1067
  %1197 = vmatprep.subr.mxu0 0.0
  %1198 = vmatpush1.msra.mxu0 %v1068
  %1199 = vmatprep.subr.mxu0 0.0
  %1200 = vmatpush1.msra.mxu0 %v1069
  %1201 = vmatprep.subr.mxu0 0.0
  %1202 = vmatpush1.msra.mxu0 %v1070
  %1203 = vmatprep.subr.mxu0 0.0
  %1204 = vmatpush1.msra.mxu0 %v1071
  %1205 = vmatprep.subr.mxu0 0.0
  %1206 = vmatpush1.msra.mxu0 %v1072
  %1207 = vmatprep.subr.mxu0 0.0
  %1208 = vmatpush1.msra.mxu0 %v1073
  %1209 = vmatprep.subr.mxu0 0.0
  %1210 = vmatpush1.msra.mxu0 %v1074
  %1211 = vmatprep.subr.mxu0 0.0
  %1212 = vmatpush1.msra.mxu0 %v1075
  %1213 = vmatprep.subr.mxu0 0.0
  %1214 = vmatpush1.msra.mxu0 %v1076
  %1215 = vmatprep.subr.mxu0 0.0
  %1216 = vmatpush1.msra.mxu0 %v1077
  %1217 = vmatprep.subr.mxu0 0.0
  %1218 = vmatpush1.msra.mxu0 %v1078
  %1219 = vmatprep.subr.mxu0 0.0
  %1220 = vmatpush1.msra.mxu0 %v1079
  %1221 = vmatprep.subr.mxu0 0.0
  %1222 = vmatpush1.msra.mxu0 %v1080
  %1223 = vmatprep.subr.mxu0 0.0
  %1224 = vmatpush1.msra.mxu0 %v1081
  %1225 = vmatprep.subr.mxu0 0.0
  %1226 = vmatpush1.msra.mxu0 %v1082
  %1227 = vmatprep.subr.mxu0 0.0
  %1228 = vmatpush1.msra.mxu0 %v1083
  %1229 = vmatprep.mubr.f32.mxu0 %v960
  %1230 = vmatmul.mubr.f32.gmra.mrb[0].mxu0 %v860
  %v1231 = vpop.f32.mrb[0].mxu0
  %v1232 = vadd.f32 %v1152, %v1231
  %v1233 = vpop.f32.mrb[0].mxu0
  %1234 = vmatprep.mubr.f32.mxu0 %v1001
  %1235 = vmatmul.mubr.f32.gmra.mrb[0].mxu0 %v901
  %v1236 = vpop.f32.mrb[0].mxu0
  %v1237 = vadd.f32 %v1157, %v1236
  %v1238 = vpop.f32.mrb[0].mxu0
  %1239 = vmatprep.mubr.f32.mxu0 %v1016
  %1240 = vmatmul.mubr.f32.gmra.mrb[0].mxu0 %v916
  %v1241 = vpop.f32.mrb[0].mxu0
  %v1242 = vadd.f32 %v1162, %v1241
  %v1243 = vpop.f32.mrb[0].mxu0
  %1244 = vdwg.mxu0
  %v1245 = vmax.f32 %v1232, 0.0
  %v1246 = vmax.f32 %v1237, 0.0
  %v1247 = vmax.f32 %v1242, 0.0
  %v1251 = vcombine.high %v1245, %v1245
  %v1253 = vunpack.c.l.s4 1966171168
  %v1254 = vunpack.c.0.s8 %v1253
  %v1255 = vlaneseq
  %v1256 = vshrl.u32 %v1255, 7
  %v1257 = vsub.s32 %v1254, %v1256
  %v1258 = vrot.slane %v1245, %v1257
  %v1260 = vunpack.c.l.s4 1966171168
  %v1261 = vunpack.c.0.s8 %v1260
  %v1262 = vlaneseq
  %v1263 = vshrl.u32 %v1262, 7
  %v1264 = vsub.s32 %v1261, %v1263
  %v1265 = vrot.slane %v1251, %v1264
  %v1266 = vcombine.high %v1258, %v1258
  %v1267 = vcombine.high %v1265, %v1265
  %v1269 = vunpack.c.l.s4 1966171168
  %v1270 = vunpack.c.0.s8 %v1269
  %v1271 = vlaneseq
  %v1272 = vshrl.u32 %v1271, 7
  %v1273 = vsub.s32 %v1270, %v1272
  %v1274 = vrot.slane %v1258, %v1273
  %v1276 = vunpack.c.l.s4 1966171168
  %v1277 = vunpack.c.0.s8 %v1276
  %v1278 = vlaneseq
  %v1279 = vshrl.u32 %v1278, 7
  %v1280 = vsub.s32 %v1277, %v1279
  %v1281 = vrot.slane %v1265, %v1280
  %v1283 = vunpack.c.l.s4 1966171168
  %v1284 = vunpack.c.0.s8 %v1283
  %v1285 = vlaneseq
  %v1286 = vshrl.u32 %v1285, 7
  %v1287 = vsub.s32 %v1284, %v1286
  %v1288 = vrot.slane %v1266, %v1287
  %v1290 = vunpack.c.l.s4 1966171168
  %v1291 = vunpack.c.0.s8 %v1290
  %v1292 = vlaneseq
  %v1293 = vshrl.u32 %v1292, 7
  %v1294 = vsub.s32 %v1291, %v1293
  %v1295 = vrot.slane %v1267, %v1294
  %v1296 = vcombine.high %v1274, %v1274
  %v1297 = vcombine.high %v1281, %v1281
  %v1298 = vcombine.high %v1288, %v1288
  %v1299 = vcombine.high %v1295, %v1295
  %v1300 = vcombine.high %v1246, %v1246
  %v1302 = vunpack.c.l.s4 1966171168
  %v1303 = vunpack.c.0.s8 %v1302
  %v1304 = vlaneseq
  %v1305 = vshrl.u32 %v1304, 7
  %v1306 = vsub.s32 %v1303, %v1305
  %v1307 = vrot.slane %v1246, %v1306
  %v1309 = vunpack.c.l.s4 1966171168
  %v1310 = vunpack.c.0.s8 %v1309
  %v1311 = vlaneseq
  %v1312 = vshrl.u32 %v1311, 7
  %v1313 = vsub.s32 %v1310, %v1312
  %v1314 = vrot.slane %v1300, %v1313
  %v1315 = vcombine.high %v1307, %v1307
  %v1316 = vcombine.high %v1314, %v1314
  %v1318 = vunpack.c.l.s4 1966171168
  %v1319 = vunpack.c.0.s8 %v1318
  %v1320 = vlaneseq
  %v1321 = vshrl.u32 %v1320, 7
  %v1322 = vsub.s32 %v1319, %v1321
  %v1323 = vrot.slane %v1307, %v1322
  %v1325 = vunpack.c.l.s4 1966171168
  %v1326 = vunpack.c.0.s8 %v1325
  %v1327 = vlaneseq
  %v1328 = vshrl.u32 %v1327, 7
  %v1329 = vsub.s32 %v1326, %v1328
  %v1330 = vrot.slane %v1314, %v1329
  %v1332 = vunpack.c.l.s4 1966171168
  %v1333 = vunpack.c.0.s8 %v1332
  %v1334 = vlaneseq
  %v1335 = vshrl.u32 %v1334, 7
  %v1336 = vsub.s32 %v1333, %v1335
  %v1337 = vrot.slane %v1315, %v1336
  %v1339 = vunpack.c.l.s4 1966171168
  %v1340 = vunpack.c.0.s8 %v1339
  %v1341 = vlaneseq
  %v1342 = vshrl.u32 %v1341, 7
  %v1343 = vsub.s32 %v1340, %v1342
  %v1344 = vrot.slane %v1316, %v1343
  %v1345 = vcombine.high %v1323, %v1323
  %v1346 = vcombine.high %v1330, %v1330
  %v1347 = vcombine.high %v1337, %v1337
  %v1348 = vcombine.high %v1344, %v1344
  %v1350 = vunpack.c.l.s4 1966171168
  %v1351 = vunpack.c.0.s8 %v1350
  %v1352 = vlaneseq
  %v1353 = vshrl.u32 %v1352, 7
  %v1354 = vsub.s32 %v1351, %v1353
  %v1355 = vrot.slane %v1247, %v1354
  %v1356 = vcombine.high %v1355, %v1355
  %v1358 = vunpack.c.l.s4 1966171168
  %v1359 = vunpack.c.0.s8 %v1358
  %v1360 = vlaneseq
  %v1361 = vshrl.u32 %v1360, 7
  %v1362 = vsub.s32 %v1359, %v1361
  %v1363 = vrot.slane %v1355, %v1362
  %v1365 = vunpack.c.l.s4 1966171168
  %v1366 = vunpack.c.0.s8 %v1365
  %v1367 = vlaneseq
  %v1368 = vshrl.u32 %v1367, 7
  %v1369 = vsub.s32 %v1366, %v1368
  %v1370 = vrot.slane %v1356, %v1369
  %v1371 = vcombine.low %v1274, %v1337
  %v1373 = vunpack.c.l.s4 1966171168
  %v1374 = vunpack.c.0.s8 %v1373
  %v1375 = vlaneseq
  %v1376 = vshrl.u32 %v1375, 7
  %v1377 = vsub.s32 %v1374, %v1376
  %v1378 = vrot.slane %v1371, %v1377
  %v1380 = vunpack.c.l.s4 1966171168
  %v1381 = vunpack.c.0.s8 %v1380
  %v1382 = vlaneseq
  %v1383 = vshrl.u32 %v1382, 7
  %v1384 = vsub.s32 %v1381, %v1383
  %v1385 = vrot.slane %v1378, %v1384
  %v1387 = vcombine.low %v1288, %v1345
  %v1389 = vunpack.c.l.s4 1966171168
  %v1390 = vunpack.c.0.s8 %v1389
  %v1391 = vlaneseq
  %v1392 = vshrl.u32 %v1391, 7
  %v1393 = vsub.s32 %v1390, %v1392
  %v1394 = vrot.slane %v1387, %v1393
  %v1396 = vunpack.c.l.s4 1966171168
  %v1397 = vunpack.c.0.s8 %v1396
  %v1398 = vlaneseq
  %v1399 = vshrl.u32 %v1398, 7
  %v1400 = vsub.s32 %v1397, %v1399
  %v1401 = vrot.slane %v1394, %v1400
  %1402 = vrot.lane.b32.xlu0 %v1401, 64
  %v1403 = vpop.permute.xlu0 %1402
  %v1405 = vcombine.low %v1296, %v1347
  %v1407 = vunpack.c.l.s4 1966171168
  %v1408 = vunpack.c.0.s8 %v1407
  %v1409 = vlaneseq
  %v1410 = vshrl.u32 %v1409, 7
  %v1411 = vsub.s32 %v1408, %v1410
  %v1412 = vrot.slane %v1405, %v1411
  %v1414 = vunpack.c.l.s4 1966171168
  %v1415 = vunpack.c.0.s8 %v1414
  %v1416 = vlaneseq
  %v1417 = vshrl.u32 %v1416, 7
  %v1418 = vsub.s32 %v1415, %v1417
  %v1419 = vrot.slane %v1412, %v1418
  %v1421 = vcombine.low %v1298, %v1330
  %v1423 = vunpack.c.l.s4 1966171168
  %v1424 = vunpack.c.0.s8 %v1423
  %v1425 = vlaneseq
  %v1426 = vshrl.u32 %v1425, 7
  %v1427 = vsub.s32 %v1424, %v1426
  %v1428 = vrot.slane %v1421, %v1427
  %v1430 = vunpack.c.l.s4 1966171168
  %v1431 = vunpack.c.0.s8 %v1430
  %v1432 = vlaneseq
  %v1433 = vshrl.u32 %v1432, 7
  %v1434 = vsub.s32 %v1431, %v1433
  %v1435 = vrot.slane %v1428, %v1434
  %1436 = vrot.lane.b32.xlu0 %v1435, 64
  %v1437 = vpop.permute.xlu0 %1436
  %v1439 = vcombine.low %v1281, %v1344
  %v1441 = vunpack.c.l.s4 1966171168
  %v1442 = vunpack.c.0.s8 %v1441
  %v1443 = vlaneseq
  %v1444 = vshrl.u32 %v1443, 7
  %v1445 = vsub.s32 %v1442, %v1444
  %v1446 = vrot.slane %v1439, %v1445
  %v1448 = vunpack.c.l.s4 1966171168
  %v1449 = vunpack.c.0.s8 %v1448
  %v1450 = vlaneseq
  %v1451 = vshrl.u32 %v1450, 7
  %v1452 = vsub.s32 %v1449, %v1451
  %v1453 = vrot.slane %v1446, %v1452
  %v1455 = vcombine.low %v1295, %v1346
  %v1457 = vunpack.c.l.s4 1966171168
  %v1458 = vunpack.c.0.s8 %v1457
  %v1459 = vlaneseq
  %v1460 = vshrl.u32 %v1459, 7
  %v1461 = vsub.s32 %v1458, %v1460
  %v1462 = vrot.slane %v1455, %v1461
  %v1464 = vunpack.c.l.s4 1966171168
  %v1465 = vunpack.c.0.s8 %v1464
  %v1466 = vlaneseq
  %v1467 = vshrl.u32 %v1466, 7
  %v1468 = vsub.s32 %v1465, %v1467
  %v1469 = vrot.slane %v1462, %v1468
  %1470 = vrot.lane.b32.xlu0 %v1469, 64
  %v1471 = vpop.permute.xlu0 %1470
  %v1473 = vcombine.low %v1297, %v1348
  %v1475 = vunpack.c.l.s4 1966171168
  %v1476 = vunpack.c.0.s8 %v1475
  %v1477 = vlaneseq
  %v1478 = vshrl.u32 %v1477, 7
  %v1479 = vsub.s32 %v1476, %v1478
  %v1480 = vrot.slane %v1473, %v1479
  %v1482 = vunpack.c.l.s4 1966171168
  %v1483 = vunpack.c.0.s8 %v1482
  %v1484 = vlaneseq
  %v1485 = vshrl.u32 %v1484, 7
  %v1486 = vsub.s32 %v1483, %v1485
  %v1487 = vrot.slane %v1480, %v1486
  %v1489 = vcombine.low %v1299, %v1363
  %v1491 = vunpack.c.l.s4 1966171168
  %v1492 = vunpack.c.0.s8 %v1491
  %v1493 = vlaneseq
  %v1494 = vshrl.u32 %v1493, 7
  %v1495 = vsub.s32 %v1492, %v1494
  %v1496 = vrot.slane %v1489, %v1495
  %v1498 = vunpack.c.l.s4 1966171168
  %v1499 = vunpack.c.0.s8 %v1498
  %v1500 = vlaneseq
  %v1501 = vshrl.u32 %v1500, 7
  %v1502 = vsub.s32 %v1499, %v1501
  %v1503 = vrot.slane %v1496, %v1502
  %1504 = vrot.lane.b32.xlu0 %v1503, 64
  %v1505 = vpop.permute.xlu0 %1504
  %v1507 = vcombine.low %v1323, %v1370
  %v1509 = vunpack.c.l.s4 1966171168
  %v1510 = vunpack.c.0.s8 %v1509
  %v1511 = vlaneseq
  %v1512 = vshrl.u32 %v1511, 7
  %v1513 = vsub.s32 %v1510, %v1512
  %v1514 = vrot.slane %v1507, %v1513
  %v1516 = vunpack.c.l.s4 1966171168
  %v1517 = vunpack.c.0.s8 %v1516
  %v1518 = vlaneseq
  %v1519 = vshrl.u32 %v1518, 7
  %v1520 = vsub.s32 %v1517, %v1519
  %v1521 = vrot.slane %v1514, %v1520
  %v1522 = vsel %vm116, %v1385, %v1403
  %v1523 = vsel %vm116, %v1419, %v1437
  %v1524 = vsel %vm116, %v1453, %v1471
  %v1525 = vsel %vm116, %v1487, %v1505
  %v1526 = vld [vmem:[%s2 + $0x200] sm:$0xff]
  %v1527 = vld [vmem:[%s2 + $0x208] sm:$0xff]
  %v1528 = vld [vmem:[%s2 + $0x210] sm:$0xff]
  %v1529 = vld [vmem:[%s2 + $0x218] sm:$0xff]
  %v1530 = vld [vmem:[%s2 + $0x220] sm:$0xff]
  %v1531 = vld [vmem:[%s2 + $0x228] sm:$0xff]
  %v1532 = vld [vmem:[%s2 + $0x230] sm:$0xff]
  %v1533 = vld [vmem:[%s2 + $0x238] sm:$0xff]
  %v1534 = vld [vmem:[%s2 + $0x240] sm:$0xff]
  %v1535 = vld [vmem:[%s2 + $0x248] sm:$0xff]
  %v1536 = vld [vmem:[%s2 + $0x250] sm:$0xff]
  %v1537 = vld [vmem:[%s2 + $0x258] sm:$0xff]
  %v1538 = vld [vmem:[%s2 + $0x260] sm:$0xff]
  %v1539 = vld [vmem:[%s2 + $0x268] sm:$0xff]
  %v1540 = vld [vmem:[%s2 + $0x270] sm:$0xff]
  %v1541 = vld [vmem:[%s2 + $0x278] sm:$0xff]
  %v1542 = vld [vmem:[%s2 + $0x280] sm:$0xff]
  %v1543 = vld [vmem:[%s2 + $0x288] sm:$0xff]
  %v1544 = vld [vmem:[%s2 + $0x290] sm:$0xff]
  %v1545 = vld [vmem:[%s2 + $0x298] sm:$0xff]
  %v1546 = vld [vmem:[%s2 + $0x2a0] sm:$0xff]
  %v1547 = vld [vmem:[%s2 + $0x2a8] sm:$0xff]
  %v1548 = vld [vmem:[%s2 + $0x2b0] sm:$0xff]
  %v1549 = vld [vmem:[%s2 + $0x2b8] sm:$0xff]
  %v1550 = vld [vmem:[%s2 + $0x2c0] sm:$0xff]
  %v1551 = vld [vmem:[%s2 + $0x2c8] sm:$0xff]
  %v1552 = vld [vmem:[%s2 + $0x2d0] sm:$0xff]
  %v1553 = vld [vmem:[%s2 + $0x2d8] sm:$0xff]
  %v1554 = vld [vmem:[%s2 + $0x2e0] sm:$0xff]
  %v1555 = vld [vmem:[%s2 + $0x2e8] sm:$0xff]
  %v1556 = vld [vmem:[%s2 + $0x2f0] sm:$0xff]
  %v1557 = vld [vmem:[%s2 + $0x2f8] sm:$0xff]
  %v1558 = vld [vmem:[%s2 + $0x300] sm:$0xff]
  %v1559 = vld [vmem:[%s2 + $0x308] sm:$0xff]
  %v1560 = vld [vmem:[%s2 + $0x310] sm:$0xff]
  %v1561 = vld [vmem:[%s2 + $0x318] sm:$0xff]
  %v1562 = vld [vmem:[%s2 + $0x320] sm:$0xff]
  %v1563 = vld [vmem:[%s2 + $0x328] sm:$0xff]
  %v1564 = vld [vmem:[%s2 + $0x330] sm:$0xff]
  %v1565 = vld [vmem:[%s2 + $0x338] sm:$0xff]
  %v1566 = vld [vmem:[%s2 + $0x340] sm:$0xff]
  %v1567 = vld [vmem:[%s2 + $0x348] sm:$0xff]
  %v1568 = vld [vmem:[%s2 + $0x350] sm:$0xff]
  %v1569 = vld [vmem:[%s2 + $0x358] sm:$0xff]
  %v1570 = vld [vmem:[%s2 + $0x360] sm:$0xff]
  %v1571 = vld [vmem:[%s2 + $0x368] sm:$0xff]
  %v1572 = vld [vmem:[%s2 + $0x370] sm:$0xff]
  %v1573 = vld [vmem:[%s2 + $0x378] sm:$0xff]
  %v1574 = vld [vmem:[%s2 + $0x380] sm:$0xff]
  %v1575 = vld [vmem:[%s2 + $0x388] sm:$0xff]
  %v1576 = vld [vmem:[%s2 + $0x390] sm:$0xff]
  %v1577 = vld [vmem:[%s2 + $0x398] sm:$0xff]
  %v1578 = vld [vmem:[%s2 + $0x3a0] sm:$0xff]
  %v1579 = vld [vmem:[%s2 + $0x3a8] sm:$0xff]
  %v1580 = vld [vmem:[%s2 + $0x3b0] sm:$0xff]
  %v1581 = vld [vmem:[%s2 + $0x3b8] sm:$0xff]
  %v1582 = vld [vmem:[%s2 + $0x3c0] sm:$0xff]
  %v1583 = vld [vmem:[%s2 + $0x3c8] sm:$0xff]
  %v1584 = vld [vmem:[%s2 + $0x3d0] sm:$0xff]
  %v1585 = vld [vmem:[%s2 + $0x3d8] sm:$0xff]
  %v1586 = vld [vmem:[%s2 + $0x3e0] sm:$0xff]
  %v1587 = vld [vmem:[%s2 + $0x3e8] sm:$0xff]
  %v1588 = vld [vmem:[%s2 + $0x3f0] sm:$0xff]
  %v1589 = vld [vmem:[%s2 + $0x3f8] sm:$0xff]
  %v1590 = vld [vmem:[%s2 + $0x400] sm:$0xff]
  %v1591 = vld [vmem:[%s2 + $0x408] sm:$0xff]
  %v1592 = vld [vmem:[%s2 + $0x410] sm:$0xff]
  %v1593 = vld [vmem:[%s2 + $0x418] sm:$0xff]
  %v1594 = vld [vmem:[%s2 + $0x420] sm:$0xff]
  %v1595 = vld [vmem:[%s2 + $0x428] sm:$0xff]
  %v1596 = vld [vmem:[%s2 + $0x430] sm:$0xff]
  %v1597 = vld [vmem:[%s2 + $0x438] sm:$0xff]
  %v1598 = vld [vmem:[%s5 + $0x2] ss:$0 sm:$0xff]
  %v1599 = vsel %vm116, %v1521, 0
  %1601 = vmatprep.subr.mxu0 0.0
  %1602 = vmatpush1.msra.mxu0 %v1526
  %1603 = vmatprep.subr.mxu0 0.0
  %1604 = vmatpush1.msra.mxu0 %v1527
  %1605 = vmatprep.subr.mxu0 0.0
  %1606 = vmatpush1.msra.mxu0 %v1528
  %1607 = vmatprep.subr.mxu0 0.0
  %1608 = vmatpush1.msra.mxu0 %v1529
  %1609 = vmatprep.subr.mxu0 0.0
  %1610 = vmatpush1.msra.mxu0 %v1530
  %1611 = vmatprep.subr.mxu0 0.0
  %1612 = vmatpush1.msra.mxu0 %v1531
  %1613 = vmatprep.subr.mxu0 0.0
  %1614 = vmatpush1.msra.mxu0 %v1532
  %1615 = vmatprep.subr.mxu0 0.0
  %1616 = vmatpush1.msra.mxu0 %v1533
  %1617 = vmatprep.subr.mxu0 0.0
  %1618 = vmatpush1.msra.mxu0 %v1534
  %1619 = vmatprep.subr.mxu0 0.0
  %1620 = vmatpush1.msra.mxu0 %v1535
  %1621 = vmatprep.subr.mxu0 0.0
  %1622 = vmatpush1.msra.mxu0 %v1536
  %1623 = vmatprep.subr.mxu0 0.0
  %1624 = vmatpush1.msra.mxu0 %v1537
  %1625 = vmatprep.subr.mxu0 0.0
  %1626 = vmatpush1.msra.mxu0 %v1538
  %1627 = vmatprep.subr.mxu0 0.0
  %1628 = vmatpush1.msra.mxu0 %v1539
  %1629 = vmatprep.subr.mxu0 0.0
  %1630 = vmatpush1.msra.mxu0 %v1540
  %1631 = vmatprep.subr.mxu0 0.0
  %1632 = vmatpush1.msra.mxu0 %v1541
  %1633 = vmatprep.subr.mxu0 0.0
  %1634 = vmatpush1.msra.mxu0 %v1542
  %1635 = vmatprep.subr.mxu0 0.0
  %1636 = vmatpush1.msra.mxu0 %v1543
  %1637 = vmatprep.subr.mxu0 0.0
  %1638 = vmatpush1.msra.mxu0 %v1544
  %1639 = vmatprep.subr.mxu0 0.0
  %1640 = vmatpush1.msra.mxu0 %v1545
  %1641 = vmatprep.subr.mxu0 0.0
  %1642 = vmatpush1.msra.mxu0 %v1546
  %1643 = vmatprep.subr.mxu0 0.0
  %1644 = vmatpush1.msra.mxu0 %v1547
  %1645 = vmatprep.subr.mxu0 0.0
  %1646 = vmatpush1.msra.mxu0 %v1548
  %1647 = vmatprep.subr.mxu0 0.0
  %1648 = vmatpush1.msra.mxu0 %v1549
  %1649 = vmatprep.subr.mxu0 0.0
  %1650 = vmatpush1.msra.mxu0 %v1550
  %1651 = vmatprep.subr.mxu0 0.0
  %1652 = vmatpush1.msra.mxu0 %v1551
  %1653 = vmatprep.subr.mxu0 0.0
  %1654 = vmatpush1.msra.mxu0 %v1552
  %1655 = vmatprep.subr.mxu0 0.0
  %1656 = vmatpush1.msra.mxu0 %v1553
  %1657 = vmatprep.subr.mxu0 0.0
  %1658 = vmatpush1.msra.mxu0 %v1554
  %1659 = vmatprep.subr.mxu0 0.0
  %1660 = vmatpush1.msra.mxu0 %v1555
  %1661 = vmatprep.subr.mxu0 0.0
  %1662 = vmatpush1.msra.mxu0 %v1556
  %1663 = vmatprep.subr.mxu0 0.0
  %1664 = vmatpush1.msra.mxu0 %v1557
  %1665 = vmatprep.mubr.f32.mxu0 %v1523
  %1666 = vmatmul.mubr.f32.gmra.mrb[0].mxu0 %v1522
  %v1667 = vpop.f32.mrb[0].mxu0
  %v1668 = vadd.f32 %v1598, %v1667
  %v1669 = vpop.f32.mrb[0].mxu0
  %1670 = vdwg.mxu0
  %1671 = vmatprep.subr.mxu0 0.0
  %1672 = vmatpush1.msra.mxu0 %v1558
  %1673 = vmatprep.subr.mxu0 0.0
  %1674 = vmatpush1.msra.mxu0 %v1559
  %1675 = vmatprep.subr.mxu0 0.0
  %1676 = vmatpush1.msra.mxu0 %v1560
  %1677 = vmatprep.subr.mxu0 0.0
  %1678 = vmatpush1.msra.mxu0 %v1561
  %1679 = vmatprep.subr.mxu0 0.0
  %1680 = vmatpush1.msra.mxu0 %v1562
  %1681 = vmatprep.subr.mxu0 0.0
  %1682 = vmatpush1.msra.mxu0 %v1563
  %1683 = vmatprep.subr.mxu0 0.0
  %1684 = vmatpush1.msra.mxu0 %v1564
  %1685 = vmatprep.subr.mxu0 0.0
  %1686 = vmatpush1.msra.mxu0 %v1565
  %1687 = vmatprep.subr.mxu0 0.0
  %1688 = vmatpush1.msra.mxu0 %v1566
  %1689 = vmatprep.subr.mxu0 0.0
  %1690 = vmatpush1.msra.mxu0 %v1567
  %1691 = vmatprep.subr.mxu0 0.0
  %1692 = vmatpush1.msra.mxu0 %v1568
  %1693 = vmatprep.subr.mxu0 0.0
  %1694 = vmatpush1.msra.mxu0 %v1569
  %1695 = vmatprep.subr.mxu0 0.0
  %1696 = vmatpush1.msra.mxu0 %v1570
  %1697 = vmatprep.subr.mxu0 0.0
  %1698 = vmatpush1.msra.mxu0 %v1571
  %1699 = vmatprep.subr.mxu0 0.0
  %1700 = vmatpush1.msra.mxu0 %v1572
  %1701 = vmatprep.subr.mxu0 0.0
  %1702 = vmatpush1.msra.mxu0 %v1573
  %1703 = vmatprep.subr.mxu0 0.0
  %1704 = vmatpush1.msra.mxu0 %v1574
  %1705 = vmatprep.subr.mxu0 0.0
  %1706 = vmatpush1.msra.mxu0 %v1575
  %1707 = vmatprep.subr.mxu0 0.0
  %1708 = vmatpush1.msra.mxu0 %v1576
  %1709 = vmatprep.subr.mxu0 0.0
  %1710 = vmatpush1.msra.mxu0 %v1577
  %1711 = vmatprep.subr.mxu0 0.0
  %1712 = vmatpush1.msra.mxu0 %v1578
  %1713 = vmatprep.subr.mxu0 0.0
  %1714 = vmatpush1.msra.mxu0 %v1579
  %1715 = vmatprep.subr.mxu0 0.0
  %1716 = vmatpush1.msra.mxu0 %v1580
  %1717 = vmatprep.subr.mxu0 0.0
  %1718 = vmatpush1.msra.mxu0 %v1581
  %1719 = vmatprep.subr.mxu0 0.0
  %1720 = vmatpush1.msra.mxu0 %v1582
  %1721 = vmatprep.subr.mxu0 0.0
  %1722 = vmatpush1.msra.mxu0 %v1583
  %1723 = vmatprep.subr.mxu0 0.0
  %1724 = vmatpush1.msra.mxu0 %v1584
  %1725 = vmatprep.subr.mxu0 0.0
  %1726 = vmatpush1.msra.mxu0 %v1585
  %1727 = vmatprep.subr.mxu0 0.0
  %1728 = vmatpush1.msra.mxu0 %v1586
  %1729 = vmatprep.subr.mxu0 0.0
  %1730 = vmatpush1.msra.mxu0 %v1587
  %1731 = vmatprep.subr.mxu0 0.0
  %1732 = vmatpush1.msra.mxu0 %v1588
  %1733 = vmatprep.subr.mxu0 0.0
  %1734 = vmatpush1.msra.mxu0 %v1589
  %1735 = vmatprep.mubr.f32.mxu0 %v1525
  %1736 = vmatmul.mubr.f32.gmra.mrb[0].mxu0 %v1524
  %v1737 = vpop.f32.mrb[0].mxu0
  %v1738 = vadd.f32 %v1668, %v1737
  %v1739 = vpop.f32.mrb[0].mxu0
  %1740 = vdwg.mxu0
  %1741 = vmatprep.subr.mxu0 0.0
  %1742 = vmatpush1.msra.mxu0 %v1590
  %1743 = vmatprep.subr.mxu0 0.0
  %1744 = vmatpush1.msra.mxu0 %v1591
  %1745 = vmatprep.subr.mxu0 0.0
  %1746 = vmatpush1.msra.mxu0 %v1592
  %1747 = vmatprep.subr.mxu0 0.0
  %1748 = vmatpush1.msra.mxu0 %v1593
  %1749 = vmatprep.subr.mxu0 0.0
  %1750 = vmatpush1.msra.mxu0 %v1594
  %1751 = vmatprep.subr.mxu0 0.0
  %1752 = vmatpush1.msra.mxu0 %v1595
  %1753 = vmatprep.subr.mxu0 0.0
  %1754 = vmatpush1.msra.mxu0 %v1596
  %1755 = vmatprep.subr.mxu0 0.0
  %1756 = vmatpush1.msra.mxu0 %v1597
  %1757 = vmatprep.subr.mxu0 0.0
  %1758 = vmatpush1.msra.mxu0 0.0
  %1759 = vmatprep.subr.mxu0 0.0
  %1760 = vmatpush1.msra.mxu0 0.0
  %1761 = vmatprep.subr.mxu0 0.0
  %1762 = vmatpush1.msra.mxu0 0.0
  %1763 = vmatprep.subr.mxu0 0.0
  %1764 = vmatpush1.msra.mxu0 0.0
  %1765 = vmatprep.subr.mxu0 0.0
  %1766 = vmatpush1.msra.mxu0 0.0
  %1767 = vmatprep.subr.mxu0 0.0
  %1768 = vmatpush1.msra.mxu0 0.0
  %1769 = vmatprep.subr.mxu0 0.0
  %1770 = vmatpush1.msra.mxu0 0.0
  %1771 = vmatprep.subr.mxu0 0.0
  %1772 = vmatpush1.msra.mxu0 0.0
  %1773 = vmatprep.subr.mxu0 0.0
  %1774 = vmatpush1.msra.mxu0 0.0
  %1775 = vmatprep.subr.mxu0 0.0
  %1776 = vmatpush1.msra.mxu0 0.0
  %1777 = vmatprep.subr.mxu0 0.0
  %1778 = vmatpush1.msra.mxu0 0.0
  %1779 = vmatprep.subr.mxu0 0.0
  %1780 = vmatpush1.msra.mxu0 0.0
  %1781 = vmatprep.subr.mxu0 0.0
  %1782 = vmatpush1.msra.mxu0 0.0
  %1783 = vmatprep.subr.mxu0 0.0
  %1784 = vmatpush1.msra.mxu0 0.0
  %1785 = vmatprep.subr.mxu0 0.0
  %1786 = vmatpush1.msra.mxu0 0.0
  %1787 = vmatprep.subr.mxu0 0.0
  %1788 = vmatpush1.msra.mxu0 0.0
  %1789 = vmatprep.subr.mxu0 0.0
  %1790 = vmatpush1.msra.mxu0 0.0
  %1791 = vmatprep.subr.mxu0 0.0
  %1792 = vmatpush1.msra.mxu0 0.0
  %1793 = vmatprep.subr.mxu0 0.0
  %1794 = vmatpush1.msra.mxu0 0.0
  %1795 = vmatprep.subr.mxu0 0.0
  %1796 = vmatpush1.msra.mxu0 0.0
  %1797 = vmatprep.subr.mxu0 0.0
  %1798 = vmatpush1.msra.mxu0 0.0
  %1799 = vmatprep.subr.mxu0 0.0
  %1800 = vmatpush1.msra.mxu0 0.0
  %1801 = vmatprep.subr.mxu0 0.0
  %1802 = vmatpush1.msra.mxu0 0.0
  %1803 = vmatprep.subr.mxu0 0.0
  %1804 = vmatpush1.msra.mxu0 0.0
  %1805 = vmatprep.mubr.f32.mxu0 0.0
  %1806 = vmatmul.mubr.f32.gmra.mrb[0].mxu0 %v1599
  %v1807 = vpop.f32.mrb[0].mxu0
  %v1808 = vadd.f32 %v1738, %v1807
  %v1809 = vpop.f32.mrb[0].mxu0
  %1810 = vdwg.mxu0
  %v1811 = vmax.f32 %v1808, 0.0
  %v1812 = vld [vmem:[%s3] sm:$0xff]
  %v1813 = vld [vmem:[%s3 + $0x8] sm:$0xff]
  %v1814 = vld [vmem:[%s3 + $0x10] sm:$0xff]
  %v1815 = vld [vmem:[%s3 + $0x18] sm:$0xff]
  %v1816 = vld [vmem:[%s3 + $0x20] sm:$0xff]
  %v1817 = vld [vmem:[%s3 + $0x28] sm:$0xff]
  %v1818 = vld [vmem:[%s3 + $0x30] sm:$0xff]
  %v1819 = vld [vmem:[%s3 + $0x38] sm:$0xff]
  %v1820 = vld [vmem:[%s3 + $0x40] sm:$0xff]
  %v1821 = vld [vmem:[%s3 + $0x48] sm:$0xff]
  %v1822 = vld [vmem:[%s3 + $0x50] sm:$0xff]
  %v1823 = vld [vmem:[%s3 + $0x58] sm:$0xff]
  %v1824 = vld [vmem:[%s3 + $0x60] sm:$0xff]
  %v1825 = vld [vmem:[%s3 + $0x68] sm:$0xff]
  %v1826 = vld [vmem:[%s3 + $0x70] sm:$0xff]
  %v1827 = vld [vmem:[%s3 + $0x78] sm:$0xff]
  %v1828 = vld [vmem:[%s3 + $0x80] sm:$0xff]
  %v1829 = vld [vmem:[%s3 + $0x88] sm:$0xff]
  %v1830 = vld [vmem:[%s3 + $0x90] sm:$0xff]
  %v1831 = vld [vmem:[%s3 + $0x98] sm:$0xff]
  %v1832 = vld [vmem:[%s3 + $0xa0] sm:$0xff]
  %v1833 = vld [vmem:[%s3 + $0xa8] sm:$0xff]
  %v1834 = vld [vmem:[%s3 + $0xb0] sm:$0xff]
  %v1835 = vld [vmem:[%s3 + $0xb8] sm:$0xff]
  %v1836 = vld [vmem:[%s3 + $0xc0] sm:$0xff]
  %v1837 = vld [vmem:[%s3 + $0xc8] sm:$0xff]
  %v1838 = vld [vmem:[%s3 + $0xd0] sm:$0xff]
  %v1839 = vld [vmem:[%s3 + $0xd8] sm:$0xff]
  %v1840 = vld [vmem:[%s3 + $0xe0] sm:$0xff]
  %v1841 = vld [vmem:[%s3 + $0xe8] sm:$0xff]
  %v1842 = vld [vmem:[%s3 + $0xf0] sm:$0xff]
  %v1843 = vld [vmem:[%s3 + $0xf8] sm:$0xff]
  %s1844 = scalar_lea.vmem %s5, 3
  %v1845 = vld [vmem:[%s1844] ss:$8 sm:$0xf]
  %v1847 = vlaneseq
  %v1848 = vshrl.u32 %v1847, 7
  %v1849 = vsub.s32 0, %v1848
  %v1850 = vrot.slane %v1845, %v1849
  %v1851 = vlaneseq
  %v1852 = vshrl.u32 %v1851, 7
  %v1853 = vsub.s32 1, %v1852
  %v1854 = vrot.slane %v1845, %v1853
  %v1855 = vlaneseq
  %v1856 = vshrl.u32 %v1855, 7
  %v1857 = vsub.s32 2, %v1856
  %v1858 = vrot.slane %v1845, %v1857
  %v1859 = vlaneseq
  %v1860 = vshrl.u32 %v1859, 7
  %v1861 = vsub.s32 3, %v1860
  %v1862 = vrot.slane %v1845, %v1861
  %v1868 = vsel %vm116, %v1811, 0
  %1870 = vmatprep.subr.mxu0 %v1813
  %1871 = vmatpush1.msra.mxu0 %v1812
  %1872 = vmatprep.subr.mxu0 %v1817
  %1873 = vmatpush1.msra.mxu0 %v1816
  %1874 = vmatprep.subr.mxu0 %v1821
  %1875 = vmatpush1.msra.mxu0 %v1820
  %1876 = vmatprep.subr.mxu0 %v1825
  %1877 = vmatpush1.msra.mxu0 %v1824
  %1878 = vmatprep.subr.mxu0 %v1829
  %1879 = vmatpush1.msra.mxu0 %v1828
  %1880 = vmatprep.subr.mxu0 %v1833
  %1881 = vmatpush1.msra.mxu0 %v1832
  %1882 = vmatprep.subr.mxu0 %v1837
  %1883 = vmatpush1.msra.mxu0 %v1836
  %1884 = vmatprep.subr.mxu0 %v1841
  %1885 = vmatpush1.msra.mxu0 %v1840
  %1886 = vmatprep.subr.mxu0 0.0
  %1887 = vmatpush1.msra.mxu0 0.0
  %1888 = vmatprep.subr.mxu0 0.0
  %1889 = vmatpush1.msra.mxu0 0.0
  %1890 = vmatprep.subr.mxu0 0.0
  %1891 = vmatpush1.msra.mxu0 0.0
  %1892 = vmatprep.subr.mxu0 0.0
  %1893 = vmatpush1.msra.mxu0 0.0
  %1894 = vmatprep.subr.mxu0 0.0
  %1895 = vmatpush1.msra.mxu0 0.0
  %1896 = vmatprep.subr.mxu0 0.0
  %1897 = vmatpush1.msra.mxu0 0.0
  %1898 = vmatprep.subr.mxu0 0.0
  %1899 = vmatpush1.msra.mxu0 0.0
  %1900 = vmatprep.subr.mxu0 0.0
  %1901 = vmatpush1.msra.mxu0 0.0
  %1902 = vmatprep.subr.mxu0 0.0
  %1903 = vmatpush1.msra.mxu0 0.0
  %1904 = vmatprep.subr.mxu0 0.0
  %1905 = vmatpush1.msra.mxu0 0.0
  %1906 = vmatprep.subr.mxu0 0.0
  %1907 = vmatpush1.msra.mxu0 0.0
  %1908 = vmatprep.subr.mxu0 0.0
  %1909 = vmatpush1.msra.mxu0 0.0
  %1910 = vmatprep.subr.mxu0 0.0
  %1911 = vmatpush1.msra.mxu0 0.0
  %1912 = vmatprep.subr.mxu0 0.0
  %1913 = vmatpush1.msra.mxu0 0.0
  %1914 = vmatprep.subr.mxu0 0.0
  %1915 = vmatpush1.msra.mxu0 0.0
  %1916 = vmatprep.subr.mxu0 0.0
  %1917 = vmatpush1.msra.mxu0 0.0
  %1918 = vmatprep.subr.mxu0 0.0
  %1919 = vmatpush1.msra.mxu0 0.0
  %1920 = vmatprep.subr.mxu0 0.0
  %1921 = vmatpush1.msra.mxu0 0.0
  %1922 = vmatprep.subr.mxu0 0.0
  %1923 = vmatpush1.msra.mxu0 0.0
  %1924 = vmatprep.subr.mxu0 0.0
  %1925 = vmatpush1.msra.mxu0 0.0
  %1926 = vmatprep.subr.mxu0 0.0
  %1927 = vmatpush1.msra.mxu0 0.0
  %1928 = vmatprep.subr.mxu0 0.0
  %1929 = vmatpush1.msra.mxu0 0.0
  %1930 = vmatprep.subr.mxu0 0.0
  %1931 = vmatpush1.msra.mxu0 0.0
  %1932 = vmatprep.subr.mxu0 0.0
  %1933 = vmatpush1.msra.mxu0 0.0
  %1934 = vmatprep.mubr.f32.mxu0 0.0
  %1935 = vmatmul.mubr.f32.gmra.mrb[0].mxu0 %v1868
  %v1936 = vpop.f32.mrb[0].mxu0
  %v1937 = vadd.f32 %v1850, %v1936
  %v1938 = vpop.f32.mrb[0].mxu0
  %v1939 = vadd.f32 %v1854, %v1938
  %1940 = vdwg.mxu0
  %1941 = vmatprep.subr.mxu0 %v1815
  %1942 = vmatpush1.msra.mxu0 %v1814
  %1943 = vmatprep.subr.mxu0 %v1819
  %1944 = vmatpush1.msra.mxu0 %v1818
  %1945 = vmatprep.subr.mxu0 %v1823
  %1946 = vmatpush1.msra.mxu0 %v1822
  %1947 = vmatprep.subr.mxu0 %v1827
  %1948 = vmatpush1.msra.mxu0 %v1826
  %1949 = vmatprep.subr.mxu0 %v1831
  %1950 = vmatpush1.msra.mxu0 %v1830
  %1951 = vmatprep.subr.mxu0 %v1835
  %1952 = vmatpush1.msra.mxu0 %v1834
  %1953 = vmatprep.subr.mxu0 %v1839
  %1954 = vmatpush1.msra.mxu0 %v1838
  %1955 = vmatprep.subr.mxu0 %v1843
  %1956 = vmatpush1.msra.mxu0 %v1842
  %1957 = vmatprep.subr.mxu0 0.0
  %1958 = vmatpush1.msra.mxu0 0.0
  %1959 = vmatprep.subr.mxu0 0.0
  %1960 = vmatpush1.msra.mxu0 0.0
  %1961 = vmatprep.subr.mxu0 0.0
  %1962 = vmatpush1.msra.mxu0 0.0
  %1963 = vmatprep.subr.mxu0 0.0
  %1964 = vmatpush1.msra.mxu0 0.0
  %1965 = vmatprep.subr.mxu0 0.0
  %1966 = vmatpush1.msra.mxu0 0.0
  %1967 = vmatprep.subr.mxu0 0.0
  %1968 = vmatpush1.msra.mxu0 0.0
  %1969 = vmatprep.subr.mxu0 0.0
  %1970 = vmatpush1.msra.mxu0 0.0
  %1971 = vmatprep.subr.mxu0 0.0
  %1972 = vmatpush1.msra.mxu0 0.0
  %1973 = vmatprep.subr.mxu0 0.0
  %1974 = vmatpush1.msra.mxu0 0.0
  %1975 = vmatprep.subr.mxu0 0.0
  %1976 = vmatpush1.msra.mxu0 0.0
  %1977 = vmatprep.subr.mxu0 0.0
  %1978 = vmatpush1.msra.mxu0 0.0
  %1979 = vmatprep.subr.mxu0 0.0
  %1980 = vmatpush1.msra.mxu0 0.0
  %1981 = vmatprep.subr.mxu0 0.0
  %1982 = vmatpush1.msra.mxu0 0.0
  %1983 = vmatprep.subr.mxu0 0.0
  %1984 = vmatpush1.msra.mxu0 0.0
  %1985 = vmatprep.subr.mxu0 0.0
  %1986 = vmatpush1.msra.mxu0 0.0
  %1987 = vmatprep.subr.mxu0 0.0
  %1988 = vmatpush1.msra.mxu0 0.0
  %1989 = vmatprep.subr.mxu0 0.0
  %1990 = vmatpush1.msra.mxu0 0.0
  %1991 = vmatprep.subr.mxu0 0.0
  %1992 = vmatpush1.msra.mxu0 0.0
  %1993 = vmatprep.subr.mxu0 0.0
  %1994 = vmatpush1.msra.mxu0 0.0
  %1995 = vmatprep.subr.mxu0 0.0
  %1996 = vmatpush1.msra.mxu0 0.0
  %1997 = vmatprep.subr.mxu0 0.0
  %1998 = vmatpush1.msra.mxu0 0.0
  %1999 = vmatprep.subr.mxu0 0.0
  %2000 = vmatpush1.msra.mxu0 0.0
  %2001 = vmatprep.subr.mxu0 0.0
  %2002 = vmatpush1.msra.mxu0 0.0
  %2003 = vmatprep.subr.mxu0 0.0
  %2004 = vmatpush1.msra.mxu0 0.0
  %2005 = vmatprep.mubr.f32.mxu0 0.0
  %2006 = vmatmul.mubr.f32.gmra.mrb[0].mxu0 %v1868
  %v2007 = vpop.f32.mrb[0].mxu0
  %v2008 = vadd.f32 %v1858, %v2007
  %v2009 = vpop.f32.mrb[0].mxu0
  %v2010 = vadd.f32 %v1862, %v2009
  %2011 = vdwg.mxu0
  %v2012 = vmax.f32 %v1937, 0.0
  %v2013 = vmax.f32 %v1939, 0.0
  %v2014 = vmax.f32 %v2008, 0.0
  %v2015 = vmax.f32 %v2010, 0.0
  %v2016 = vld [vmem:[%s4] sm:$0xff]
  %v2017 = vld [vmem:[%s4 + $0x8] sm:$0xff]
  %v2018 = vld [vmem:[%s4 + $0x10] sm:$0xff]
  %v2019 = vld [vmem:[%s4 + $0x18] sm:$0xff]
  %v2020 = vld [vmem:[%s4 + $0x20] sm:$0xff]
  %v2021 = vld [vmem:[%s4 + $0x28] sm:$0xff]
  %v2022 = vld [vmem:[%s4 + $0x30] sm:$0xff]
  %v2023 = vld [vmem:[%s4 + $0x38] sm:$0xff]
  %v2024 = vld [vmem:[%s4 + $0x40] sm:$0xff]
  %v2025 = vld [vmem:[%s4 + $0x48] sm:$0xff]
  %v2026 = vld [vmem:[%s4 + $0x50] sm:$0xff]
  %v2027 = vld [vmem:[%s4 + $0x58] sm:$0xff]
  %v2028 = vld [vmem:[%s4 + $0x60] sm:$0xff]
  %v2029 = vld [vmem:[%s4 + $0x68] sm:$0xff]
  %v2030 = vld [vmem:[%s4 + $0x70] sm:$0xff]
  %v2031 = vld [vmem:[%s4 + $0x78] sm:$0xff]
  %v2032 = vld [vmem:[%s4 + $0x80] sm:$0xff]
  %v2033 = vld [vmem:[%s4 + $0x88] sm:$0xff]
  %v2034 = vld [vmem:[%s4 + $0x90] sm:$0xff]
  %v2035 = vld [vmem:[%s4 + $0x98] sm:$0xff]
  %v2036 = vld [vmem:[%s4 + $0xa0] sm:$0xff]
  %v2037 = vld [vmem:[%s4 + $0xa8] sm:$0xff]
  %v2038 = vld [vmem:[%s4 + $0xb0] sm:$0xff]
  %v2039 = vld [vmem:[%s4 + $0xb8] sm:$0xff]
  %v2040 = vld [vmem:[%s4 + $0xc0] sm:$0xff]
  %v2041 = vld [vmem:[%s4 + $0xc8] sm:$0xff]
  %v2042 = vld [vmem:[%s4 + $0xd0] sm:$0xff]
  %v2043 = vld [vmem:[%s4 + $0xd8] sm:$0xff]
  %v2044 = vld [vmem:[%s4 + $0xe0] sm:$0xff]
  %v2045 = vld [vmem:[%s4 + $0xe8] sm:$0xff]
  %v2046 = vld [vmem:[%s4 + $0xf0] sm:$0xff]
  %v2047 = vld [vmem:[%s4 + $0xf8] sm:$0xff]
  %v2048 = vld [vmem:[%s4 + $0x100] sm:$0xff]
  %v2049 = vld [vmem:[%s4 + $0x108] sm:$0xff]
  %v2050 = vld [vmem:[%s4 + $0x110] sm:$0xff]
  %v2051 = vld [vmem:[%s4 + $0x118] sm:$0xff]
  %v2052 = vld [vmem:[%s4 + $0x120] sm:$0xff]
  %v2053 = vld [vmem:[%s4 + $0x128] sm:$0xff]
  %v2054 = vld [vmem:[%s4 + $0x130] sm:$0xff]
  %v2055 = vld [vmem:[%s4 + $0x138] sm:$0xff]
  %v2056 = vld [vmem:[%s4 + $0x140] sm:$0xff]
  %v2057 = vld [vmem:[%s4 + $0x148] sm:$0xff]
  %v2058 = vld [vmem:[%s4 + $0x150] sm:$0xff]
  %v2059 = vld [vmem:[%s4 + $0x158] sm:$0xff]
  %v2060 = vld [vmem:[%s4 + $0x160] sm:$0xff]
  %v2061 = vld [vmem:[%s4 + $0x168] sm:$0xff]
  %v2062 = vld [vmem:[%s4 + $0x170] sm:$0xff]
  %v2063 = vld [vmem:[%s4 + $0x178] sm:$0xff]
  %v2064 = vld [vmem:[%s4 + $0x180] sm:$0xff]
  %v2065 = vld [vmem:[%s4 + $0x188] sm:$0xff]
  %v2066 = vld [vmem:[%s4 + $0x190] sm:$0xff]
  %v2067 = vld [vmem:[%s4 + $0x198] sm:$0xff]
  %v2068 = vld [vmem:[%s4 + $0x1a0] sm:$0xff]
  %v2069 = vld [vmem:[%s4 + $0x1a8] sm:$0xff]
  %v2070 = vld [vmem:[%s4 + $0x1b0] sm:$0xff]
  %v2071 = vld [vmem:[%s4 + $0x1b8] sm:$0xff]
  %v2072 = vld [vmem:[%s4 + $0x1c0] sm:$0xff]
  %v2073 = vld [vmem:[%s4 + $0x1c8] sm:$0xff]
  %v2074 = vld [vmem:[%s4 + $0x1d0] sm:$0xff]
  %v2075 = vld [vmem:[%s4 + $0x1d8] sm:$0xff]
  %v2076 = vld [vmem:[%s4 + $0x1e0] sm:$0xff]
  %v2077 = vld [vmem:[%s4 + $0x1e8] sm:$0xff]
  %v2078 = vld [vmem:[%s4 + $0x1f0] sm:$0xff]
  %v2079 = vld [vmem:[%s4 + $0x1f8] sm:$0xff]
  %v2080 = vld [vmem:[%s5 + $0x4] ss:$0 sm:$0xff]
  %2081 = vmatprep.subr.mxu0 0.0
  %2082 = vmatpush1.msra.mxu0 %v2016
  %2083 = vmatprep.subr.mxu0 0.0
  %2084 = vmatpush1.msra.mxu0 %v2017
  %2085 = vmatprep.subr.mxu0 0.0
  %2086 = vmatpush1.msra.mxu0 %v2018
  %2087 = vmatprep.subr.mxu0 0.0
  %2088 = vmatpush1.msra.mxu0 %v2019
  %2089 = vmatprep.subr.mxu0 0.0
  %2090 = vmatpush1.msra.mxu0 %v2020
  %2091 = vmatprep.subr.mxu0 0.0
  %2092 = vmatpush1.msra.mxu0 %v2021
  %2093 = vmatprep.subr.mxu0 0.0
  %2094 = vmatpush1.msra.mxu0 %v2022
  %2095 = vmatprep.subr.mxu0 0.0
  %2096 = vmatpush1.msra.mxu0 %v2023
  %2097 = vmatprep.subr.mxu0 0.0
  %2098 = vmatpush1.msra.mxu0 %v2024
  %2099 = vmatprep.subr.mxu0 0.0
  %2100 = vmatpush1.msra.mxu0 %v2025
  %2101 = vmatprep.subr.mxu0 0.0
  %2102 = vmatpush1.msra.mxu0 %v2026
  %2103 = vmatprep.subr.mxu0 0.0
  %2104 = vmatpush1.msra.mxu0 %v2027
  %2105 = vmatprep.subr.mxu0 0.0
  %2106 = vmatpush1.msra.mxu0 %v2028
  %2107 = vmatprep.subr.mxu0 0.0
  %2108 = vmatpush1.msra.mxu0 %v2029
  %2109 = vmatprep.subr.mxu0 0.0
  %2110 = vmatpush1.msra.mxu0 %v2030
  %2111 = vmatprep.subr.mxu0 0.0
  %2112 = vmatpush1.msra.mxu0 %v2031
  %2113 = vmatprep.subr.mxu0 0.0
  %2114 = vmatpush1.msra.mxu0 %v2032
  %2115 = vmatprep.subr.mxu0 0.0
  %2116 = vmatpush1.msra.mxu0 %v2033
  %2117 = vmatprep.subr.mxu0 0.0
  %2118 = vmatpush1.msra.mxu0 %v2034
  %2119 = vmatprep.subr.mxu0 0.0
  %2120 = vmatpush1.msra.mxu0 %v2035
  %2121 = vmatprep.subr.mxu0 0.0
  %2122 = vmatpush1.msra.mxu0 %v2036
  %2123 = vmatprep.subr.mxu0 0.0
  %2124 = vmatpush1.msra.mxu0 %v2037
  %2125 = vmatprep.subr.mxu0 0.0
  %2126 = vmatpush1.msra.mxu0 %v2038
  %2127 = vmatprep.subr.mxu0 0.0
  %2128 = vmatpush1.msra.mxu0 %v2039
  %2129 = vmatprep.subr.mxu0 0.0
  %2130 = vmatpush1.msra.mxu0 %v2040
  %2131 = vmatprep.subr.mxu0 0.0
  %2132 = vmatpush1.msra.mxu0 %v2041
  %2133 = vmatprep.subr.mxu0 0.0
  %2134 = vmatpush1.msra.mxu0 %v2042
  %2135 = vmatprep.subr.mxu0 0.0
  %2136 = vmatpush1.msra.mxu0 %v2043
  %2137 = vmatprep.subr.mxu0 0.0
  %2138 = vmatpush1.msra.mxu0 %v2044
  %2139 = vmatprep.subr.mxu0 0.0
  %2140 = vmatpush1.msra.mxu0 %v2045
  %2141 = vmatprep.subr.mxu0 0.0
  %2142 = vmatpush1.msra.mxu0 %v2046
  %2143 = vmatprep.subr.mxu0 0.0
  %2144 = vmatpush1.msra.mxu0 %v2047
  %2145 = vmatprep.mubr.f32.mxu0 %v2013
  %2146 = vmatmul.mubr.f32.gmra.mrb[0].mxu0 %v2012
  %v2147 = vpop.f32.mrb[0].mxu0
  %v2148 = vadd.f32 %v2080, %v2147
  %v2149 = vpop.f32.mrb[0].mxu0
  %2150 = vdwg.mxu0
  %2151 = vmatprep.subr.mxu0 0.0
  %2152 = vmatpush1.msra.mxu0 %v2048
  %2153 = vmatprep.subr.mxu0 0.0
  %2154 = vmatpush1.msra.mxu0 %v2049
  %2155 = vmatprep.subr.mxu0 0.0
  %2156 = vmatpush1.msra.mxu0 %v2050
  %2157 = vmatprep.subr.mxu0 0.0
  %2158 = vmatpush1.msra.mxu0 %v2051
  %2159 = vmatprep.subr.mxu0 0.0
  %2160 = vmatpush1.msra.mxu0 %v2052
  %2161 = vmatprep.subr.mxu0 0.0
  %2162 = vmatpush1.msra.mxu0 %v2053
  %2163 = vmatprep.subr.mxu0 0.0
  %2164 = vmatpush1.msra.mxu0 %v2054
  %2165 = vmatprep.subr.mxu0 0.0
  %2166 = vmatpush1.msra.mxu0 %v2055
  %2167 = vmatprep.subr.mxu0 0.0
  %2168 = vmatpush1.msra.mxu0 %v2056
  %2169 = vmatprep.subr.mxu0 0.0
  %2170 = vmatpush1.msra.mxu0 %v2057
  %2171 = vmatprep.subr.mxu0 0.0
  %2172 = vmatpush1.msra.mxu0 %v2058
  %2173 = vmatprep.subr.mxu0 0.0
  %2174 = vmatpush1.msra.mxu0 %v2059
  %2175 = vmatprep.subr.mxu0 0.0
  %2176 = vmatpush1.msra.mxu0 %v2060
  %2177 = vmatprep.subr.mxu0 0.0
  %2178 = vmatpush1.msra.mxu0 %v2061
  %2179 = vmatprep.subr.mxu0 0.0
  %2180 = vmatpush1.msra.mxu0 %v2062
  %2181 = vmatprep.subr.mxu0 0.0
  %2182 = vmatpush1.msra.mxu0 %v2063
  %2183 = vmatprep.subr.mxu0 0.0
  %2184 = vmatpush1.msra.mxu0 %v2064
  %2185 = vmatprep.subr.mxu0 0.0
  %2186 = vmatpush1.msra.mxu0 %v2065
  %2187 = vmatprep.subr.mxu0 0.0
  %2188 = vmatpush1.msra.mxu0 %v2066
  %2189 = vmatprep.subr.mxu0 0.0
  %2190 = vmatpush1.msra.mxu0 %v2067
  %2191 = vmatprep.subr.mxu0 0.0
  %2192 = vmatpush1.msra.mxu0 %v2068
  %2193 = vmatprep.subr.mxu0 0.0
  %2194 = vmatpush1.msra.mxu0 %v2069
  %2195 = vmatprep.subr.mxu0 0.0
  %2196 = vmatpush1.msra.mxu0 %v2070
  %2197 = vmatprep.subr.mxu0 0.0
  %2198 = vmatpush1.msra.mxu0 %v2071
  %2199 = vmatprep.subr.mxu0 0.0
  %2200 = vmatpush1.msra.mxu0 %v2072
  %2201 = vmatprep.subr.mxu0 0.0
  %2202 = vmatpush1.msra.mxu0 %v2073
  %2203 = vmatprep.subr.mxu0 0.0
  %2204 = vmatpush1.msra.mxu0 %v2074
  %2205 = vmatprep.subr.mxu0 0.0
  %2206 = vmatpush1.msra.mxu0 %v2075
  %2207 = vmatprep.subr.mxu0 0.0
  %2208 = vmatpush1.msra.mxu0 %v2076
  %2209 = vmatprep.subr.mxu0 0.0
  %2210 = vmatpush1.msra.mxu0 %v2077
  %2211 = vmatprep.subr.mxu0 0.0
  %2212 = vmatpush1.msra.mxu0 %v2078
  %2213 = vmatprep.subr.mxu0 0.0
  %2214 = vmatpush1.msra.mxu0 %v2079
  %2215 = vmatprep.mubr.f32.mxu0 %v2015
  %2216 = vmatmul.mubr.f32.gmra.mrb[0].mxu0 %v2014
  %v2217 = vpop.f32.mrb[0].mxu0
  %v2218 = vadd.f32 %v2148, %v2217
  %v2219 = vpop.f32.mrb[0].mxu0
  %2220 = vdwg.mxu0
  %2221 = vst [vmem:[%s6] sm:$0x3] %v2218
  // Predicated region
  $region26: #{qrdqn_forward.1} parent=0 // pred_check
    _
  $region27: #{qrdqn_forward.1} parent=0 // pred_check_branch
    %2223 = sbr.rel (0) target = $region29
  $region28: #{qrdqn_forward.1} parent=0 // pred_region
    _
  $region29: #{qrdqn_forward.1} parent=0 // pred_fallthru
    _
  // Predicated region
  $region30: #{qrdqn_forward.1} parent=0 // pred_check
    _
  $region31: #{qrdqn_forward.1} parent=0 // pred_check_branch
    %2225 = sbr.rel (0) target = $region33
  $region32: #{qrdqn_forward.1} parent=0 // pred_region
    _
  $region33: #{qrdqn_forward.1} parent=0 // pred_fallthru
    _

</llo_original>
